<compile_context>
chip_gen: v7x
topology: tpu7x:2x2x1
jax: 0.10.0
libtpu: 0.0.40
codegen_flags: <defaults>
</compile_context>

<pallas_src>
import jax
import jax.numpy as jnp
from jax.experimental import pallas as pl
from jax.experimental.pallas import tpu as pltpu

# ---- problem sizes (small, consistent with an LSS forward) -----------------
B, C_IN, H, W = 2, 8, 16, 16      # batch, image feature channels, spatial
D_BINS = 8                        # depth bins predicted per pixel
C_CTX = 16                        # lifted context channels
CD = C_CTX * D_BINS               # 128 -> lane-dense lift / BEV width
HW = H * W                        # 256 pixels per batch element


# ---------------------------------------------------------------------------
# Fused kernel: depth-net (1x1 conv) + softmax + lane-dense lift + splat.
# One grid step handles one full batch element and writes its row-pooled BEV
# slab directly -- the frustum volume never touches HBM.
# ---------------------------------------------------------------------------
def lss_fused_kernel(x_ref, wd_ref, wce_ref, exp_ref, pool_ref, o_ref):
    x = x_ref[0]                                   # [HW, C_IN]   (f32)
    w_depth = wd_ref[...]                          # [C_IN, D_BINS]
    w_ctx_exp = wce_ref[...]                       # [C_IN, CD]  (ctx chan repeated D times)
    expand = exp_ref[...]                          # [D_BINS, CD] constant 0/1
    pool = pool_ref[...]                           # [W, HW]      constant 0/1 row-pooling

    # depth-net as two MXU dots (no narrow-lane slice afterwards)
    d_logits = jnp.dot(x, w_depth, preferred_element_type=jnp.float32)    # [HW, D]
    ctx_exp = jnp.dot(x, w_ctx_exp, preferred_element_type=jnp.float32)   # [HW, CD]

    # softmax over depth bins
    m = jnp.max(d_logits, axis=-1, keepdims=True)
    e = jnp.exp(d_logits - m)
    denom = jnp.sum(e, axis=-1, keepdims=True)
    depth = e * pl.reciprocal(denom, approx=False)                        # [HW, D]

    # lane-dense lift: expand depth [HW, D] -> [HW, CD] via a constant 0/1
    # MXU matmul (lane c*D+d picks bin d), then one full-width VPU multiply.
    depth_exp = jnp.dot(depth, expand, preferred_element_type=jnp.float32)  # [HW, CD]
    lifted = ctx_exp * depth_exp                                            # [HW, CD]

    # splat: pool the frustum over image rows with a 0/1 MXU matmul instead
    # of a cross-sublane reshape+reduce -> BEV slab [W, CD]
    bev = jnp.dot(pool, lifted, preferred_element_type=jnp.float32)         # [W, CD]
    o_ref[...] = bev[None].astype(o_ref.dtype)     # output block [1, W, CD]


# ---------------------------------------------------------------------------
# Forward pass mirroring LSSBase.forward(input_dict)
# ---------------------------------------------------------------------------
def lss_forward(input_dict, params):
    x = input_dict["img"]                          # NCHW [B, C_IN, H, W]
    # img_backbone is None in the reference __init__ -> features pass through.
    # TODO(synk): reference forward/lift/splat are stubs; the camera-geometry
    # voxel scatter of full LSS splat is replaced by a row-pooled BEV grid.
    x_flat = jnp.transpose(x, (0, 2, 3, 1)).reshape(B, HW, C_IN)

    w = params["w_depthnet"].astype(jnp.float32)   # [C_IN, D_BINS + C_CTX]
    w_depth = w[:, :D_BINS]                        # [C_IN, D]
    # replicate each context channel D_BINS times along lanes so the matmul
    # output is already the lane-dense [HW, C_CTX*D] context slab
    w_ctx_exp = jnp.repeat(w[:, D_BINS:], D_BINS, axis=1)                 # [C_IN, CD]
    # 0/1 matrix expanding depth probs [*, D] -> [*, CD] (lane j <- bin j % D)
    expand = (jnp.arange(CD)[None, :] % D_BINS
              == jnp.arange(D_BINS)[:, None]).astype(jnp.float32)         # [D, CD]
    # 0/1 row-pooling matrix: pool[w, p] = 1 iff pixel p sits in image column w
    pool = (jnp.arange(HW)[None, :] % W
            == jnp.arange(W)[:, None]).astype(jnp.float32)                # [W, HW]

    # TODO(synk): at production LSS sizes (D~100, C~64, ~8k px/cam) cast x and
    # weights to bf16 and re-derive the pixel tile against v7x's 64 MiB VMEM.
    bev = pl.pallas_call(
        lss_fused_kernel,
        out_shape=jax.ShapeDtypeStruct((B, W, CD), jnp.float32),
        grid_spec=pltpu.PrefetchScalarGridSpec(
            num_scalar_prefetch=0,
            grid=(B,),                                       # one camera/batch per step
            in_specs=[
                pl.BlockSpec((1, HW, C_IN), lambda b: (b, 0, 0)),
                pl.BlockSpec((C_IN, D_BINS), lambda b: (0, 0)),
                pl.BlockSpec((C_IN, CD), lambda b: (0, 0)),
                pl.BlockSpec((D_BINS, CD), lambda b: (0, 0)),
                pl.BlockSpec((W, HW), lambda b: (0, 0)),
            ],
            out_specs=pl.BlockSpec((1, W, CD), lambda b: (b, 0, 0)),
        ),
        # batch axis parallel -> sharded across both TensorCores on v7x
        compiler_params=pltpu.CompilerParams(
            dimension_semantics=("parallel",)),
    )(x_flat, w_depth, w_ctx_exp, expand, pool)
    return bev                                               # [B, W, C_CTX*D_BINS]


# ---------------------------------------------------------------------------
# Pure-JAX reference for correctness checking
# ---------------------------------------------------------------------------
def lss_forward_ref(input_dict, params):
    x = input_dict["img"].astype(jnp.float32)
    x_flat = jnp.transpose(x, (0, 2, 3, 1)).reshape(B, HW, C_IN)
    logits = jnp.einsum("bpc,cd->bpd", x_flat,
                        params["w_depthnet"].astype(jnp.float32))
    d_logits, ctx = logits[..., :D_BINS], logits[..., D_BINS:]
    depth = jax.nn.softmax(d_logits, axis=-1)
    lifted = (ctx[..., :, None] * depth[..., None, :]).reshape(B, H, W, CD)
    return lifted.sum(axis=1)                                # [B, W, CD]


if __name__ == "__main__":
    key = jax.random.PRNGKey(0)
    k_img, k_w = jax.random.split(key)

    img = jax.random.normal(k_img, (B, C_IN, H, W), dtype=jnp.float32)
    # deterministic depth-net weight (1x1 conv == channel matmul)
    w_depthnet = (jax.random.normal(k_w, (C_IN, D_BINS + C_CTX),
                                    dtype=jnp.float32) * 0.1)

    input_dict = {"img": img}
    params = {"w_depthnet": w_depthnet}

    out = jax.block_until_ready(lss_forward(input_dict, params))
    ref = lss_forward_ref(input_dict, params)

    assert out.shape == (B, W, CD), out.shape
    assert jnp.allclose(out, ref, atol=1e-3, rtol=1e-3), "mismatch vs reference"

    print("KERNEL_OK")
</pallas_src>

<mosaic_0001>
module attributes {stable_mosaic.version = 11 : i64} {
  func.func @lss_fused_kernel(%arg0: i32, %arg1: memref<1x256x8xf32, #tpu.memory_space<vmem>>, %arg2: memref<8x8xf32, #tpu.memory_space<vmem>>, %arg3: memref<8x128xf32, #tpu.memory_space<vmem>>, %arg4: memref<8x128xf32, #tpu.memory_space<vmem>>, %arg5: memref<16x256xf32, #tpu.memory_space<vmem>>, %arg6: memref<1x16x128xf32, #tpu.memory_space<vmem>>) attributes {dimension_semantics = [#tpu.dimension_semantics<parallel>], iteration_bounds = array<i64: 2>, scalar_prefetch = 0 : i64, scratch_operands = 0 : i64, tpu.core_type = #tpu.core_type<tc>, window_params = [{transform_indices = @transform_0, window_bounds = array<i64: 1, 256, 8>}, {pipeline_mode = #tpu.pipeline_mode<synchronous>, transform_indices = @transform_1, window_bounds = array<i64: 8, 8>}, {pipeline_mode = #tpu.pipeline_mode<synchronous>, transform_indices = @transform_2, window_bounds = array<i64: 8, 128>}, {pipeline_mode = #tpu.pipeline_mode<synchronous>, transform_indices = @transform_3, window_bounds = array<i64: 8, 128>}, {pipeline_mode = #tpu.pipeline_mode<synchronous>, transform_indices = @transform_4, window_bounds = array<i64: 16, 256>}, {transform_indices = @transform_5, window_bounds = array<i64: 1, 16, 128>}]} {
    %c0 = arith.constant 0 : index
    %c0_0 = arith.constant 0 : index
    %c0_1 = arith.constant 0 : index
    %0 = vector.load %arg1[%c0, %c0_0, %c0_1] : memref<1x256x8xf32, #tpu.memory_space<vmem>>, vector<1x256x8xf32>
    %1 = vector.shape_cast %0 : vector<1x256x8xf32> to vector<256x8xf32>
    %c0_2 = arith.constant 0 : index
    %c0_3 = arith.constant 0 : index
    %2 = vector.load %arg2[%c0_2, %c0_3] : memref<8x8xf32, #tpu.memory_space<vmem>>, vector<8x8xf32>
    %c0_4 = arith.constant 0 : index
    %c0_5 = arith.constant 0 : index
    %3 = vector.load %arg3[%c0_4, %c0_5] : memref<8x128xf32, #tpu.memory_space<vmem>>, vector<8x128xf32>
    %c0_6 = arith.constant 0 : index
    %c0_7 = arith.constant 0 : index
    %4 = vector.load %arg4[%c0_6, %c0_7] : memref<8x128xf32, #tpu.memory_space<vmem>>, vector<8x128xf32>
    %c0_8 = arith.constant 0 : index
    %c0_9 = arith.constant 0 : index
    %5 = vector.load %arg5[%c0_8, %c0_9] : memref<16x256xf32, #tpu.memory_space<vmem>>, vector<16x256xf32>
    %cst = arith.constant dense<0.000000e+00> : vector<256x8xf32>
    %6 = tpu.matmul %1, %2, %cst {dimension_numbers = #tpu.dot_dimension_numbers<[1], [0], [0], [1], [0, 0, 1, 1], [], []>} : vector<256x8xf32>, vector<8x8xf32>, vector<256x8xf32> -> vector<256x8xf32>
    %cst_10 = arith.constant dense<0.000000e+00> : vector<256x128xf32>
    %7 = tpu.matmul %1, %3, %cst_10 {dimension_numbers = #tpu.dot_dimension_numbers<[1], [0], [0], [1], [0, 0, 1, 1], [], []>} : vector<256x8xf32>, vector<8x128xf32>, vector<256x128xf32> -> vector<256x128xf32>
    %cst_11 = arith.constant dense<0xFF800000> : vector<256xf32>
    %8 = vector.multi_reduction <maximumf>, %6, %cst_11 [1] : vector<256x8xf32> to vector<256xf32>
    %9 = vector.shape_cast %8 : vector<256xf32> to vector<256x1xf32>
    %10 = vector.broadcast %9 : vector<256x1xf32> to vector<256x8xf32>
    %11 = arith.subf %6, %10 : vector<256x8xf32>
    %12 = math.exp %11 : vector<256x8xf32>
    %cst_12 = arith.constant dense<0.000000e+00> : vector<256xf32>
    %13 = vector.multi_reduction <add>, %12, %cst_12 [1] : vector<256x8xf32> to vector<256xf32>
    %14 = vector.shape_cast %13 : vector<256xf32> to vector<256x1xf32>
    %15 = tpu.reciprocal %14 : vector<256x1xf32> -> vector<256x1xf32>
    %16 = vector.broadcast %15 : vector<256x1xf32> to vector<256x8xf32>
    %17 = arith.mulf %12, %16 : vector<256x8xf32>
    %cst_13 = arith.constant dense<0.000000e+00> : vector<256x128xf32>
    %18 = tpu.matmul %17, %4, %cst_13 {dimension_numbers = #tpu.dot_dimension_numbers<[1], [0], [0], [1], [0, 0, 1, 1], [], []>} : vector<256x8xf32>, vector<8x128xf32>, vector<256x128xf32> -> vector<256x128xf32>
    %19 = arith.mulf %7, %18 : vector<256x128xf32>
    %cst_14 = arith.constant dense<0.000000e+00> : vector<16x128xf32>
    %20 = tpu.matmul %5, %19, %cst_14 {dimension_numbers = #tpu.dot_dimension_numbers<[1], [0], [0], [1], [0, 0, 1, 1], [], []>} : vector<16x256xf32>, vector<256x128xf32>, vector<16x128xf32> -> vector<16x128xf32>
    %21 = vector.shape_cast %20 : vector<16x128xf32> to vector<1x16x128xf32>
    %c0_15 = arith.constant 0 : index
    %c0_16 = arith.constant 0 : index
    %c0_17 = arith.constant 0 : index
    %22 = vector.load %arg6[%c0_15, %c0_16, %c0_17] : memref<1x16x128xf32, #tpu.memory_space<vmem>>, vector<1x16x128xf32>
    tpu.vector_store %arg6[%c0_15, %c0_16, %c0_17], %21 {strides = array<i32>} : memref<1x16x128xf32, #tpu.memory_space<vmem>>, vector<1x16x128xf32>,
    return
  }
  func.func @transform_0(%arg0: i32) -> (i32, i32, i32) {
    %c0_i32 = arith.constant 0 : i32
    %c0_i32_0 = arith.constant 0 : i32
    %c0_i32_1 = arith.constant 0 : i32
    return %arg0, %c0_i32, %c0_i32_0 : i32, i32, i32
  }
  func.func @transform_1(%arg0: i32) -> (i32, i32) {
    %c0_i32 = arith.constant 0 : i32
    %c0_i32_0 = arith.constant 0 : i32
    %c0_i32_1 = arith.constant 0 : i32
    return %c0_i32, %c0_i32_0 : i32, i32
  }
  func.func @transform_2(%arg0: i32) -> (i32, i32) {
    %c0_i32 = arith.constant 0 : i32
    %c0_i32_0 = arith.constant 0 : i32
    %c0_i32_1 = arith.constant 0 : i32
    return %c0_i32, %c0_i32_0 : i32, i32
  }
  func.func @transform_3(%arg0: i32) -> (i32, i32) {
    %c0_i32 = arith.constant 0 : i32
    %c0_i32_0 = arith.constant 0 : i32
    %c0_i32_1 = arith.constant 0 : i32
    return %c0_i32, %c0_i32_0 : i32, i32
  }
  func.func @transform_4(%arg0: i32) -> (i32, i32) {
    %c0_i32 = arith.constant 0 : i32
    %c0_i32_0 = arith.constant 0 : i32
    %c0_i32_1 = arith.constant 0 : i32
    return %c0_i32, %c0_i32_0 : i32, i32
  }
  func.func @transform_5(%arg0: i32) -> (i32, i32, i32) {
    %c0_i32 = arith.constant 0 : i32
    %c0_i32_0 = arith.constant 0 : i32
    %c0_i32_1 = arith.constant 0 : i32
    return %arg0, %c0_i32, %c0_i32_0 : i32, i32, i32
  }
}

</mosaic_0001>

<llo_original>
// kernel: tpu_custom_call.1
$region0: #{tpu_custom_call.1}
  #allocation0 [shape = 'u32[]', space=smem, size = 0x4, offset = 0x4, fixed_abs, tag = 'smem constant byte address 0x4 - core index']
  #allocation1 [shape = 'u32[144,128]{1,0:T(1,128)}', space=vmem, size = 0x12000, scoped, tag = 'internal scratch']
  %s0 = inlined_call_operand.vmem [shape: f32[2,256,8], index: 0, kind: input, shape index: {}]
  %s1 = inlined_call_operand.vmem [shape: f32[8,8], index: 1, kind: input, shape index: {}]
  %s2 = inlined_call_operand.vmem [shape: f32[8,128], index: 2, kind: input, shape index: {}]
  %s3 = inlined_call_operand.vmem [shape: f32[8,128], index: 3, kind: input, shape index: {}]
  %s4 = inlined_call_operand.vmem [shape: f32[16,256], index: 4, kind: input, shape index: {}]
  %s5 = inlined_call_operand.hbm [shape: f32[2,16,128], index: 5, kind: output, shape index: {}]
  %s6 = sld [smem:[#allocation0]]
  $region53: #{tpu_custom_call.1} parent=0
    _
  %s8 = ssub.s32 1, %s6
  %s9 = scalar_select 0, %s8, %s6
  $region1: #{tpu_custom_call.1} parent=0
    #allocation2 [shape = 'u8[16384]{0}', space=vmem, size = 0x4000, scoped, tag = 'output window, operand 0']
    #allocation3 [shape = 's32[2]{0}', space=sflag, size = 0x8, scoped, tag = 'scoped memory for tpu_custom_call.1']
    %10 = vsyncpa [#allocation3], 0
    %s11 = scalar_lea.sflag [#allocation3], 1
    %12 = vsyncpa %s11, 0
    loop: start=0, step=1, limit=4
    $region2: #{tpu_custom_call.1} parent=1 // loop_pre_header
      _
    $region3: #{tpu_custom_call.1} parent=1 // loop_header
      %s14 = sphi 0, %s18
      %p15 = scmp.ge.s32.totalorder %s14, 4
      %s24 = sphi 0, %s26
      %s27 = sphi 0, %s24
      %s28 = sphi 0, %s27
      %s44 = sphi 0, %s28
      %s48 = sphi 0, %s48
      %s50 = sphi 0, %s48
      %s51 = sphi 0, %s50
      %s65 = sphi 0, %s51
      %s69 = sphi 0, %s69
      %s71 = sphi 0, %s69
      %s72 = sphi 0, %s71
      %s86 = sphi 0, %s72
      %s90 = sphi 0, %s90
      %s92 = sphi 0, %s90
      %s93 = sphi 0, %s92
      %s107 = sphi 0, %s93
      %s111 = sphi 0, %s111
      %s113 = sphi 0, %s111
      %s114 = sphi 0, %s113
      %s128 = sphi 0, %s114
      %s134 = sphi 0, %s136
      %s137 = sphi 0, %s134
      %s138 = sphi 0, %s137
      %s154 = sphi 0, %s138
    $region4: #{tpu_custom_call.1} parent=1 // loop_header_branch
      %17 = sbr.rel (%p15) target = $region8
    $region5: #{tpu_custom_call.1} parent=1 // loop_body
      %s19 = ssub.s32 %s14, 1
      %s20 = ssub.s32 %s14, 2
      %s21 = sadd.s32 %s14, 1
      %s22 = ssub.s32 %s14, %s21
      %p23 = scmp.eq.s32.totalorder %s22, 0
      %s25 = sadd.s32 %s24, 1
      %s26 = scalar_select %p23, %s24, %s25
      %p29 = pneg %p23
      %p30 = scmp.eq.s32.totalorder %s14, 1
      %p31 = por %p29, %p30
      %p32 = scmp.ne.s32.totalorder %s24, %s27
      %p33 = scmp.eq.s32.totalorder %s14, 0
      %p34 = por %p32, %p33
      %p35 = scmp.ne.s32.totalorder %s24, %s27
      %p36 = scmp.eq.s32.totalorder %s19, 1
      %p37 = por %p35, %p36
      %p38 = scmp.ne.s32.totalorder %s27, %s28
      %p39 = scmp.eq.s32.totalorder %s19, 0
      %p40 = por %p38, %p39
      %p41 = scmp.ne.s32.totalorder %s27, %s28
      %p42 = scmp.eq.s32.totalorder %s20, 1
      %p43 = por %p41, %p42
      %p45 = scmp.ne.s32.totalorder %s28, %s44
      %p46 = scmp.eq.s32.totalorder %s20, 0
      %p47 = por %p45, %p46
      %s49 = sadd.s32 %s48, 1
      %p52 = scmp.eq.s32.totalorder %s14, 1
      %p53 = scmp.ne.s32.totalorder %s48, %s50
      %p54 = scmp.eq.s32.totalorder %s14, 0
      %p55 = por %p53, %p54
      %p56 = scmp.ne.s32.totalorder %s48, %s50
      %p57 = scmp.eq.s32.totalorder %s19, 1
      %p58 = por %p56, %p57
      %p59 = scmp.ne.s32.totalorder %s50, %s51
      %p60 = scmp.eq.s32.totalorder %s19, 0
      %p61 = por %p59, %p60
      %p62 = scmp.ne.s32.totalorder %s50, %s51
      %p63 = scmp.eq.s32.totalorder %s20, 1
      %p64 = por %p62, %p63
      %p66 = scmp.ne.s32.totalorder %s51, %s65
      %p67 = scmp.eq.s32.totalorder %s20, 0
      %p68 = por %p66, %p67
      %s70 = sadd.s32 %s69, 1
      %p73 = scmp.eq.s32.totalorder %s14, 1
      %p74 = scmp.ne.s32.totalorder %s69, %s71
      %p75 = scmp.eq.s32.totalorder %s14, 0
      %p76 = por %p74, %p75
      %p77 = scmp.ne.s32.totalorder %s69, %s71
      %p78 = scmp.eq.s32.totalorder %s19, 1
      %p79 = por %p77, %p78
      %p80 = scmp.ne.s32.totalorder %s71, %s72
      %p81 = scmp.eq.s32.totalorder %s19, 0
      %p82 = por %p80, %p81
      %p83 = scmp.ne.s32.totalorder %s71, %s72
      %p84 = scmp.eq.s32.totalorder %s20, 1
      %p85 = por %p83, %p84
      %p87 = scmp.ne.s32.totalorder %s72, %s86
      %p88 = scmp.eq.s32.totalorder %s20, 0
      %p89 = por %p87, %p88
      %s91 = sadd.s32 %s90, 1
      %p94 = scmp.eq.s32.totalorder %s14, 1
      %p95 = scmp.ne.s32.totalorder %s90, %s92
      %p96 = scmp.eq.s32.totalorder %s14, 0
      %p97 = por %p95, %p96
      %p98 = scmp.ne.s32.totalorder %s90, %s92
      %p99 = scmp.eq.s32.totalorder %s19, 1
      %p100 = por %p98, %p99
      %p101 = scmp.ne.s32.totalorder %s92, %s93
      %p102 = scmp.eq.s32.totalorder %s19, 0
      %p103 = por %p101, %p102
      %p104 = scmp.ne.s32.totalorder %s92, %s93
      %p105 = scmp.eq.s32.totalorder %s20, 1
      %p106 = por %p104, %p105
      %p108 = scmp.ne.s32.totalorder %s93, %s107
      %p109 = scmp.eq.s32.totalorder %s20, 0
      %p110 = por %p108, %p109
      %s112 = sadd.s32 %s111, 1
      %p115 = scmp.eq.s32.totalorder %s14, 1
      %p116 = scmp.ne.s32.totalorder %s111, %s113
      %p117 = scmp.eq.s32.totalorder %s14, 0
      %p118 = por %p116, %p117
      %p119 = scmp.ne.s32.totalorder %s111, %s113
      %p120 = scmp.eq.s32.totalorder %s19, 1
      %p121 = por %p119, %p120
      %p122 = scmp.ne.s32.totalorder %s113, %s114
      %p123 = scmp.eq.s32.totalorder %s19, 0
      %p124 = por %p122, %p123
      %p125 = scmp.ne.s32.totalorder %s113, %s114
      %p126 = scmp.eq.s32.totalorder %s20, 1
      %p127 = por %p125, %p126
      %p129 = scmp.ne.s32.totalorder %s114, %s128
      %p130 = scmp.eq.s32.totalorder %s20, 0
      %p131 = por %p129, %p130
      %s132 = ssub.s32 %s14, %s21
      %p133 = scmp.eq.s32.totalorder %s132, 0
      %s135 = sadd.s32 %s134, 1
      %s136 = scalar_select %p133, %s134, %s135
      %p139 = pneg %p133
      %p140 = scmp.eq.s32.totalorder %s14, 1
      %p141 = por %p139, %p140
      %p142 = scmp.ne.s32.totalorder %s134, %s137
      %p143 = scmp.eq.s32.totalorder %s14, 0
      %p144 = por %p142, %p143
      %p145 = scmp.ne.s32.totalorder %s134, %s137
      %p146 = scmp.eq.s32.totalorder %s19, 1
      %p147 = por %p145, %p146
      %p148 = scmp.ne.s32.totalorder %s137, %s138
      %p149 = scmp.eq.s32.totalorder %s19, 0
      %p150 = por %p148, %p149
      %p151 = scmp.ne.s32.totalorder %s137, %s138
      %p152 = scmp.eq.s32.totalorder %s20, 1
      %p153 = por %p151, %p152
      %p155 = scmp.ne.s32.totalorder %s138, %s154
      %p156 = scmp.eq.s32.totalorder %s20, 0
      %p157 = por %p155, %p156
      %p158 = scmp.le.s32.totalorder 1, %s14
      %p159 = scmp.lt.s32.totalorder %s14, 3
      %p160 = pnand %p158, %p159
      %p161 = pneg %p160
      // Predicated region
      $region9: #{tpu_custom_call.1} parent=5 // pred_check
        _
      $region10: #{tpu_custom_call.1} parent=5 // pred_check_branch
        %163 = sbr.rel (%p160) target = $region12
      $region11: #{tpu_custom_call.1} parent=5 // pred_region
        %s164 = ssub.s32 %s14, 1
        // Predicated region
        $region13: #{tpu_custom_call.1} parent=11 // pred_check
          %p165 = pneg %p61
        $region14: #{tpu_custom_call.1} parent=11 // pred_check_branch
          %167 = sbr.rel (%p165) target = $region16
        $region15: #{tpu_custom_call.1} parent=11 // pred_region
          _
        $region16: #{tpu_custom_call.1} parent=11 // pred_fallthru
          _
        // Predicated region
        $region17: #{tpu_custom_call.1} parent=11 // pred_check
          %p168 = pneg %p82
        $region18: #{tpu_custom_call.1} parent=11 // pred_check_branch
          %170 = sbr.rel (%p168) target = $region20
        $region19: #{tpu_custom_call.1} parent=11 // pred_region
          _
        $region20: #{tpu_custom_call.1} parent=11 // pred_fallthru
          _
        // Predicated region
        $region21: #{tpu_custom_call.1} parent=11 // pred_check
          %p171 = pneg %p103
        $region22: #{tpu_custom_call.1} parent=11 // pred_check_branch
          %173 = sbr.rel (%p171) target = $region24
        $region23: #{tpu_custom_call.1} parent=11 // pred_region
          _
        $region24: #{tpu_custom_call.1} parent=11 // pred_fallthru
          _
        // Predicated region
        $region25: #{tpu_custom_call.1} parent=11 // pred_check
          %p174 = pneg %p124
        $region26: #{tpu_custom_call.1} parent=11 // pred_check_branch
          %176 = sbr.rel (%p174) target = $region28
        $region27: #{tpu_custom_call.1} parent=11 // pred_region
          _
        $region28: #{tpu_custom_call.1} parent=11 // pred_fallthru
          _
      $region12: #{tpu_custom_call.1} parent=5 // pred_fallthru
        _
      %p177 = scmp.lt.s32.totalorder %s14, 2
      // Predicated region
      $region29: #{tpu_custom_call.1} parent=5 // pred_check
        %p178 = pneg %p177
      $region30: #{tpu_custom_call.1} parent=5 // pred_check_branch
        %180 = sbr.rel (%p178) target = $region32
      $region31: #{tpu_custom_call.1} parent=5 // pred_region
        // Predicated region
        $region33: #{tpu_custom_call.1} parent=31 // pred_check
          %p181 = pneg %p34
        $region34: #{tpu_custom_call.1} parent=31 // pred_check_branch
          %183 = sbr.rel (%p181) target = $region36
        $region35: #{tpu_custom_call.1} parent=31 // pred_region
          %p184 = scmp.lt.s32.totalorder %s14, 1
          %s185 = scalar_select %p184, %s14, 1
          %s186 = smul.addr %s185, 32
          %s187 = smul.addr %s186, 8
          %s188 = scalar_lea.vmem %s0, %s187
        $region36: #{tpu_custom_call.1} parent=31 // pred_fallthru
          _
      $region32: #{tpu_custom_call.1} parent=5 // pred_fallthru
        _
      %p189 = scmp.le.s32.totalorder 1, %s14
      %p190 = scmp.lt.s32.totalorder %s14, 3
      %p191 = pnand %p189, %p190
      %p192 = pneg %p191
      // Predicated region
      $region37: #{tpu_custom_call.1} parent=5 // pred_check
        _
      $region38: #{tpu_custom_call.1} parent=5 // pred_check_branch
        %194 = sbr.rel (%p191) target = $region40
      $region39: #{tpu_custom_call.1} parent=5 // pred_region
        %s195 = ssub.s32 %s14, 1
        %p196 = scmp.lt.s32.totalorder %s19, 1
        %s197 = scalar_select %p196, %s19, 1
        %s198 = smul.addr %s197, 32
        %s199 = smul.addr %s198, 8
        %s200 = scalar_lea.vmem %s0, %s199
        %p201 = pneg %p40
        %p202 = pneg %p37
        %p203 = pneg %p61
        %p204 = pneg %p58
        %p205 = pneg %p82
        %p206 = pneg %p79
        %p207 = pneg %p103
        %p208 = pneg %p100
        %p209 = pneg %p124
        %p210 = pneg %p121
        %p211 = pneg %p150
        %p212 = pneg %p147
        %s213 = sand.u32 %s137, 1
        %s214 = scalar_lea.sflag [#allocation3], %s213
        %s215 = sand.u32 %s137, 1
        %s216 = smul.addr %s215, 16
        %s217 = scalar_lea.vmem [#allocation2], %s216
        %p218 = scmp.lt.s32.totalorder %s19, 1
        %s219 = scalar_select %p218, %s19, 1
        %s220 = smul.addr %s219, 32
        %s221 = smul.addr %s220, 8
        %s222 = scalar_lea.vmem %s0, %s221
        %v223 = vld [vmem:[%s222] sm:$0xff]
        %v224 = vld [vmem:[%s222 + $0x8] sm:$0xff]
        %v225 = vld [vmem:[%s222 + $0x10] sm:$0xff]
        %v226 = vld [vmem:[%s222 + $0x18] sm:$0xff]
        %v227 = vld [vmem:[%s222 + $0x20] sm:$0xff]
        %v228 = vld [vmem:[%s222 + $0x28] sm:$0xff]
        %v229 = vld [vmem:[%s222 + $0x30] sm:$0xff]
        %v230 = vld [vmem:[%s222 + $0x38] sm:$0xff]
        %v231 = vld [vmem:[%s222 + $0x40] sm:$0xff]
        %v232 = vld [vmem:[%s222 + $0x48] sm:$0xff]
        %v233 = vld [vmem:[%s222 + $0x50] sm:$0xff]
        %v234 = vld [vmem:[%s222 + $0x58] sm:$0xff]
        %v235 = vld [vmem:[%s222 + $0x60] sm:$0xff]
        %v236 = vld [vmem:[%s222 + $0x68] sm:$0xff]
        %v237 = vld [vmem:[%s222 + $0x70] sm:$0xff]
        %v238 = vld [vmem:[%s222 + $0x78] sm:$0xff]
        %v239 = vld [vmem:[%s222 + $0x80] sm:$0xff]
        %v240 = vld [vmem:[%s222 + $0x88] sm:$0xff]
        %v241 = vld [vmem:[%s222 + $0x90] sm:$0xff]
        %v242 = vld [vmem:[%s222 + $0x98] sm:$0xff]
        %v243 = vld [vmem:[%s222 + $0xa0] sm:$0xff]
        %v244 = vld [vmem:[%s222 + $0xa8] sm:$0xff]
        %v245 = vld [vmem:[%s222 + $0xb0] sm:$0xff]
        %v246 = vld [vmem:[%s222 + $0xb8] sm:$0xff]
        %v247 = vld [vmem:[%s222 + $0xc0] sm:$0xff]
        %v248 = vld [vmem:[%s222 + $0xc8] sm:$0xff]
        %v249 = vld [vmem:[%s222 + $0xd0] sm:$0xff]
        %v250 = vld [vmem:[%s222 + $0xd8] sm:$0xff]
        %v251 = vld [vmem:[%s222 + $0xe0] sm:$0xff]
        %v252 = vld [vmem:[%s222 + $0xe8] sm:$0xff]
        %v253 = vld [vmem:[%s222 + $0xf0] sm:$0xff]
        %v254 = vld [vmem:[%s222 + $0xf8] sm:$0xff]
        %v255 = vld [vmem:[%s1] sm:$0xff]
        %v256 = vld [vmem:[%s2] sm:$0xff]
        %v257 = vld [vmem:[%s3] sm:$0xff]
        %v258 = vld [vmem:[%s4] sm:$0xff]
        %v259 = vld [vmem:[%s4 + $0x8] sm:$0xff]
        %v260 = vld [vmem:[%s4 + $0x10] sm:$0xff]
        %v261 = vld [vmem:[%s4 + $0x18] sm:$0xff]
        %vm262 = vcmask 64512
        %v264 = vsel %vm262, %v223, 0
        %v267 = vsel %vm262, %v224, 0
        %v270 = vsel %vm262, %v225, 0
        %v273 = vsel %vm262, %v226, 0
        %v276 = vsel %vm262, %v227, 0
        %v279 = vsel %vm262, %v228, 0
        %v282 = vsel %vm262, %v229, 0
        %v285 = vsel %vm262, %v230, 0
        %v288 = vsel %vm262, %v231, 0
        %v291 = vsel %vm262, %v232, 0
        %v294 = vsel %vm262, %v233, 0
        %v297 = vsel %vm262, %v234, 0
        %v300 = vsel %vm262, %v235, 0
        %v303 = vsel %vm262, %v236, 0
        %v306 = vsel %vm262, %v237, 0
        %v309 = vsel %vm262, %v238, 0
        %v312 = vsel %vm262, %v239, 0
        %v315 = vsel %vm262, %v240, 0
        %v318 = vsel %vm262, %v241, 0
        %v321 = vsel %vm262, %v242, 0
        %v324 = vsel %vm262, %v243, 0
        %v327 = vsel %vm262, %v244, 0
        %v330 = vsel %vm262, %v245, 0
        %v333 = vsel %vm262, %v246, 0
        %v336 = vsel %vm262, %v247, 0
        %v339 = vsel %vm262, %v248, 0
        %v342 = vsel %vm262, %v249, 0
        %v345 = vsel %vm262, %v250, 0
        %v348 = vsel %vm262, %v251, 0
        %v351 = vsel %vm262, %v252, 0
        %v354 = vsel %vm262, %v253, 0
        %v357 = vsel %vm262, %v254, 0
        %359 = vmatprep.subr.mxu0 0.0
        %360 = vmatpush1.msra.mxu0 %v255
        %361 = vmatprep.subr.mxu0 0.0
        %362 = vmatpush1.msra.mxu0 0.0
        %363 = vmatprep.subr.mxu0 0.0
        %364 = vmatpush1.msra.mxu0 0.0
        %365 = vmatprep.subr.mxu0 0.0
        %366 = vmatpush1.msra.mxu0 0.0
        %367 = vmatprep.subr.mxu0 0.0
        %368 = vmatpush1.msra.mxu0 0.0
        %369 = vmatprep.subr.mxu0 0.0
        %370 = vmatpush1.msra.mxu0 0.0
        %371 = vmatprep.subr.mxu0 0.0
        %372 = vmatpush1.msra.mxu0 0.0
        %373 = vmatprep.subr.mxu0 0.0
        %374 = vmatpush1.msra.mxu0 0.0
        %375 = vmatprep.subr.mxu0 0.0
        %376 = vmatpush1.msra.mxu0 0.0
        %377 = vmatprep.subr.mxu0 0.0
        %378 = vmatpush1.msra.mxu0 0.0
        %379 = vmatprep.subr.mxu0 0.0
        %380 = vmatpush1.msra.mxu0 0.0
        %381 = vmatprep.subr.mxu0 0.0
        %382 = vmatpush1.msra.mxu0 0.0
        %383 = vmatprep.subr.mxu0 0.0
        %384 = vmatpush1.msra.mxu0 0.0
        %385 = vmatprep.subr.mxu0 0.0
        %386 = vmatpush1.msra.mxu0 0.0
        %387 = vmatprep.subr.mxu0 0.0
        %388 = vmatpush1.msra.mxu0 0.0
        %389 = vmatprep.subr.mxu0 0.0
        %390 = vmatpush1.msra.mxu0 0.0
        %391 = vmatprep.subr.mxu0 0.0
        %392 = vmatpush1.msra.mxu0 0.0
        %393 = vmatprep.subr.mxu0 0.0
        %394 = vmatpush1.msra.mxu0 0.0
        %395 = vmatprep.subr.mxu0 0.0
        %396 = vmatpush1.msra.mxu0 0.0
        %397 = vmatprep.subr.mxu0 0.0
        %398 = vmatpush1.msra.mxu0 0.0
        %399 = vmatprep.subr.mxu0 0.0
        %400 = vmatpush1.msra.mxu0 0.0
        %401 = vmatprep.subr.mxu0 0.0
        %402 = vmatpush1.msra.mxu0 0.0
        %403 = vmatprep.subr.mxu0 0.0
        %404 = vmatpush1.msra.mxu0 0.0
        %405 = vmatprep.subr.mxu0 0.0
        %406 = vmatpush1.msra.mxu0 0.0
        %407 = vmatprep.subr.mxu0 0.0
        %408 = vmatpush1.msra.mxu0 0.0
        %409 = vmatprep.subr.mxu0 0.0
        %410 = vmatpush1.msra.mxu0 0.0
        %411 = vmatprep.subr.mxu0 0.0
        %412 = vmatpush1.msra.mxu0 0.0
        %413 = vmatprep.subr.mxu0 0.0
        %414 = vmatpush1.msra.mxu0 0.0
        %415 = vmatprep.subr.mxu0 0.0
        %416 = vmatpush1.msra.mxu0 0.0
        %417 = vmatprep.subr.mxu0 0.0
        %418 = vmatpush1.msra.mxu0 0.0
        %419 = vmatprep.subr.mxu0 0.0
        %420 = vmatpush1.msra.mxu0 0.0
        %421 = vmatprep.subr.mxu0 0.0
        %422 = vmatpush1.msra.mxu0 0.0
        %423 = vmatprep.mubr.f32.mxu0 0.0
        %424 = vmatmul.mubr.f32.gmra.mrb[0].mxu0 %v264
        %v425 = vpop.f32.mrb[0].mxu0
        %v426 = vadd.f32 0.0, %v425
        %v427 = vpop.f32.mrb[0].mxu0
        %428 = vmatprep.mubr.f32.mxu0 0.0
        %429 = vmatmul.mubr.f32.gmra.mrb[0].mxu0 %v267
        %v430 = vpop.f32.mrb[0].mxu0
        %v431 = vadd.f32 0.0, %v430
        %v432 = vpop.f32.mrb[0].mxu0
        %433 = vmatprep.mubr.f32.mxu0 0.0
        %434 = vmatmul.mubr.f32.gmra.mrb[0].mxu0 %v270
        %v435 = vpop.f32.mrb[0].mxu0
        %v436 = vadd.f32 0.0, %v435
        %v437 = vpop.f32.mrb[0].mxu0
        %438 = vmatprep.mubr.f32.mxu0 0.0
        %439 = vmatmul.mubr.f32.gmra.mrb[0].mxu0 %v273
        %v440 = vpop.f32.mrb[0].mxu0
        %v441 = vadd.f32 0.0, %v440
        %v442 = vpop.f32.mrb[0].mxu0
        %443 = vmatprep.mubr.f32.mxu0 0.0
        %444 = vmatmul.mubr.f32.gmra.mrb[0].mxu0 %v276
        %v445 = vpop.f32.mrb[0].mxu0
        %v446 = vadd.f32 0.0, %v445
        %v447 = vpop.f32.mrb[0].mxu0
        %448 = vmatprep.mubr.f32.mxu0 0.0
        %449 = vmatmul.mubr.f32.gmra.mrb[0].mxu0 %v279
        %v450 = vpop.f32.mrb[0].mxu0
        %v451 = vadd.f32 0.0, %v450
        %v452 = vpop.f32.mrb[0].mxu0
        %453 = vmatprep.mubr.f32.mxu0 0.0
        %454 = vmatmul.mubr.f32.gmra.mrb[0].mxu0 %v282
        %v455 = vpop.f32.mrb[0].mxu0
        %v456 = vadd.f32 0.0, %v455
        %v457 = vpop.f32.mrb[0].mxu0
        %458 = vmatprep.mubr.f32.mxu0 0.0
        %459 = vmatmul.mubr.f32.gmra.mrb[0].mxu0 %v285
        %v460 = vpop.f32.mrb[0].mxu0
        %v461 = vadd.f32 0.0, %v460
        %v462 = vpop.f32.mrb[0].mxu0
        %463 = vmatprep.mubr.f32.mxu0 0.0
        %464 = vmatmul.mubr.f32.gmra.mrb[0].mxu0 %v288
        %v465 = vpop.f32.mrb[0].mxu0
        %v466 = vadd.f32 0.0, %v465
        %v467 = vpop.f32.mrb[0].mxu0
        %468 = vmatprep.mubr.f32.mxu0 0.0
        %469 = vmatmul.mubr.f32.gmra.mrb[0].mxu0 %v291
        %v470 = vpop.f32.mrb[0].mxu0
        %v471 = vadd.f32 0.0, %v470
        %v472 = vpop.f32.mrb[0].mxu0
        %473 = vmatprep.mubr.f32.mxu0 0.0
        %474 = vmatmul.mubr.f32.gmra.mrb[0].mxu0 %v294
        %v475 = vpop.f32.mrb[0].mxu0
        %v476 = vadd.f32 0.0, %v475
        %v477 = vpop.f32.mrb[0].mxu0
        %478 = vmatprep.mubr.f32.mxu0 0.0
        %479 = vmatmul.mubr.f32.gmra.mrb[0].mxu0 %v297
        %v480 = vpop.f32.mrb[0].mxu0
        %v481 = vadd.f32 0.0, %v480
        %v482 = vpop.f32.mrb[0].mxu0
        %483 = vmatprep.mubr.f32.mxu0 0.0
        %484 = vmatmul.mubr.f32.gmra.mrb[0].mxu0 %v300
        %v485 = vpop.f32.mrb[0].mxu0
        %v486 = vadd.f32 0.0, %v485
        %v487 = vpop.f32.mrb[0].mxu0
        %488 = vmatprep.mubr.f32.mxu0 0.0
        %489 = vmatmul.mubr.f32.gmra.mrb[0].mxu0 %v303
        %v490 = vpop.f32.mrb[0].mxu0
        %v491 = vadd.f32 0.0, %v490
        %v492 = vpop.f32.mrb[0].mxu0
        %493 = vmatprep.mubr.f32.mxu0 0.0
        %494 = vmatmul.mubr.f32.gmra.mrb[0].mxu0 %v306
        %v495 = vpop.f32.mrb[0].mxu0
        %v496 = vadd.f32 0.0, %v495
        %v497 = vpop.f32.mrb[0].mxu0
        %498 = vmatprep.mubr.f32.mxu0 0.0
        %499 = vmatmul.mubr.f32.gmra.mrb[0].mxu0 %v309
        %v500 = vpop.f32.mrb[0].mxu0
        %v501 = vadd.f32 0.0, %v500
        %v502 = vpop.f32.mrb[0].mxu0
        %503 = vmatprep.mubr.f32.mxu0 0.0
        %504 = vmatmul.mubr.f32.gmra.mrb[0].mxu0 %v312
        %v505 = vpop.f32.mrb[0].mxu0
        %v506 = vadd.f32 0.0, %v505
        %v507 = vpop.f32.mrb[0].mxu0
        %508 = vmatprep.mubr.f32.mxu0 0.0
        %509 = vmatmul.mubr.f32.gmra.mrb[0].mxu0 %v315
        %v510 = vpop.f32.mrb[0].mxu0
        %v511 = vadd.f32 0.0, %v510
        %v512 = vpop.f32.mrb[0].mxu0
        %513 = vmatprep.mubr.f32.mxu0 0.0
        %514 = vmatmul.mubr.f32.gmra.mrb[0].mxu0 %v318
        %v515 = vpop.f32.mrb[0].mxu0
        %v516 = vadd.f32 0.0, %v515
        %v517 = vpop.f32.mrb[0].mxu0
        %518 = vmatprep.mubr.f32.mxu0 0.0
        %519 = vmatmul.mubr.f32.gmra.mrb[0].mxu0 %v321
        %v520 = vpop.f32.mrb[0].mxu0
        %v521 = vadd.f32 0.0, %v520
        %v522 = vpop.f32.mrb[0].mxu0
        %523 = vmatprep.mubr.f32.mxu0 0.0
        %524 = vmatmul.mubr.f32.gmra.mrb[0].mxu0 %v324
        %v525 = vpop.f32.mrb[0].mxu0
        %v526 = vadd.f32 0.0, %v525
        %v527 = vpop.f32.mrb[0].mxu0
        %528 = vmatprep.mubr.f32.mxu0 0.0
        %529 = vmatmul.mubr.f32.gmra.mrb[0].mxu0 %v327
        %v530 = vpop.f32.mrb[0].mxu0
        %v531 = vadd.f32 0.0, %v530
        %v532 = vpop.f32.mrb[0].mxu0
        %533 = vmatprep.mubr.f32.mxu0 0.0
        %534 = vmatmul.mubr.f32.gmra.mrb[0].mxu0 %v330
        %v535 = vpop.f32.mrb[0].mxu0
        %v536 = vadd.f32 0.0, %v535
        %v537 = vpop.f32.mrb[0].mxu0
        %538 = vmatprep.mubr.f32.mxu0 0.0
        %539 = vmatmul.mubr.f32.gmra.mrb[0].mxu0 %v333
        %v540 = vpop.f32.mrb[0].mxu0
        %v541 = vadd.f32 0.0, %v540
        %v542 = vpop.f32.mrb[0].mxu0
        %543 = vmatprep.mubr.f32.mxu0 0.0
        %544 = vmatmul.mubr.f32.gmra.mrb[0].mxu0 %v336
        %v545 = vpop.f32.mrb[0].mxu0
        %v546 = vadd.f32 0.0, %v545
        %v547 = vpop.f32.mrb[0].mxu0
        %548 = vmatprep.mubr.f32.mxu0 0.0
        %549 = vmatmul.mubr.f32.gmra.mrb[0].mxu0 %v339
        %v550 = vpop.f32.mrb[0].mxu0
        %v551 = vadd.f32 0.0, %v550
        %v552 = vpop.f32.mrb[0].mxu0
        %553 = vmatprep.mubr.f32.mxu0 0.0
        %554 = vmatmul.mubr.f32.gmra.mrb[0].mxu0 %v342
        %v555 = vpop.f32.mrb[0].mxu0
        %v556 = vadd.f32 0.0, %v555
        %v557 = vpop.f32.mrb[0].mxu0
        %558 = vmatprep.mubr.f32.mxu0 0.0
        %559 = vmatmul.mubr.f32.gmra.mrb[0].mxu0 %v345
        %v560 = vpop.f32.mrb[0].mxu0
        %v561 = vadd.f32 0.0, %v560
        %v562 = vpop.f32.mrb[0].mxu0
        %563 = vmatprep.mubr.f32.mxu0 0.0
        %564 = vmatmul.mubr.f32.gmra.mrb[0].mxu0 %v348
        %v565 = vpop.f32.mrb[0].mxu0
        %v566 = vadd.f32 0.0, %v565
        %v567 = vpop.f32.mrb[0].mxu0
        %568 = vmatprep.mubr.f32.mxu0 0.0
        %569 = vmatmul.mubr.f32.gmra.mrb[0].mxu0 %v351
        %v570 = vpop.f32.mrb[0].mxu0
        %v571 = vadd.f32 0.0, %v570
        %v572 = vpop.f32.mrb[0].mxu0
        %573 = vmatprep.mubr.f32.mxu0 0.0
        %574 = vmatmul.mubr.f32.gmra.mrb[0].mxu0 %v354
        %v575 = vpop.f32.mrb[0].mxu0
        %v576 = vadd.f32 0.0, %v575
        %v577 = vpop.f32.mrb[0].mxu0
        %578 = vmatprep.mubr.f32.mxu0 0.0
        %579 = vmatmul.mubr.f32.gmra.mrb[0].mxu0 %v357
        %v580 = vpop.f32.mrb[0].mxu0
        %v581 = vadd.f32 0.0, %v580
        %v582 = vpop.f32.mrb[0].mxu0
        %583 = vdwg.mxu0
        %584 = vmatprep.subr.mxu0 0.0
        %585 = vmatpush1.msra.mxu0 %v256
        %586 = vmatprep.subr.mxu0 0.0
        %587 = vmatpush1.msra.mxu0 0.0
        %588 = vmatprep.subr.mxu0 0.0
        %589 = vmatpush1.msra.mxu0 0.0
        %590 = vmatprep.subr.mxu0 0.0
        %591 = vmatpush1.msra.mxu0 0.0
        %592 = vmatprep.subr.mxu0 0.0
        %593 = vmatpush1.msra.mxu0 0.0
        %594 = vmatprep.subr.mxu0 0.0
        %595 = vmatpush1.msra.mxu0 0.0
        %596 = vmatprep.subr.mxu0 0.0
        %597 = vmatpush1.msra.mxu0 0.0
        %598 = vmatprep.subr.mxu0 0.0
        %599 = vmatpush1.msra.mxu0 0.0
        %600 = vmatprep.subr.mxu0 0.0
        %601 = vmatpush1.msra.mxu0 0.0
        %602 = vmatprep.subr.mxu0 0.0
        %603 = vmatpush1.msra.mxu0 0.0
        %604 = vmatprep.subr.mxu0 0.0
        %605 = vmatpush1.msra.mxu0 0.0
        %606 = vmatprep.subr.mxu0 0.0
        %607 = vmatpush1.msra.mxu0 0.0
        %608 = vmatprep.subr.mxu0 0.0
        %609 = vmatpush1.msra.mxu0 0.0
        %610 = vmatprep.subr.mxu0 0.0
        %611 = vmatpush1.msra.mxu0 0.0
        %612 = vmatprep.subr.mxu0 0.0
        %613 = vmatpush1.msra.mxu0 0.0
        %614 = vmatprep.subr.mxu0 0.0
        %615 = vmatpush1.msra.mxu0 0.0
        %616 = vmatprep.subr.mxu0 0.0
        %617 = vmatpush1.msra.mxu0 0.0
        %618 = vmatprep.subr.mxu0 0.0
        %619 = vmatpush1.msra.mxu0 0.0
        %620 = vmatprep.subr.mxu0 0.0
        %621 = vmatpush1.msra.mxu0 0.0
        %622 = vmatprep.subr.mxu0 0.0
        %623 = vmatpush1.msra.mxu0 0.0
        %624 = vmatprep.subr.mxu0 0.0
        %625 = vmatpush1.msra.mxu0 0.0
        %626 = vmatprep.subr.mxu0 0.0
        %627 = vmatpush1.msra.mxu0 0.0
        %628 = vmatprep.subr.mxu0 0.0
        %629 = vmatpush1.msra.mxu0 0.0
        %630 = vmatprep.subr.mxu0 0.0
        %631 = vmatpush1.msra.mxu0 0.0
        %632 = vmatprep.subr.mxu0 0.0
        %633 = vmatpush1.msra.mxu0 0.0
        %634 = vmatprep.subr.mxu0 0.0
        %635 = vmatpush1.msra.mxu0 0.0
        %636 = vmatprep.subr.mxu0 0.0
        %637 = vmatpush1.msra.mxu0 0.0
        %638 = vmatprep.subr.mxu0 0.0
        %639 = vmatpush1.msra.mxu0 0.0
        %640 = vmatprep.subr.mxu0 0.0
        %641 = vmatpush1.msra.mxu0 0.0
        %642 = vmatprep.subr.mxu0 0.0
        %643 = vmatpush1.msra.mxu0 0.0
        %644 = vmatprep.subr.mxu0 0.0
        %645 = vmatpush1.msra.mxu0 0.0
        %646 = vmatprep.subr.mxu0 0.0
        %647 = vmatpush1.msra.mxu0 0.0
        %648 = vmatprep.mubr.f32.mxu0 0.0
        %649 = vmatmul.mubr.f32.gmra.mrb[0].mxu0 %v264
        %v650 = vpop.f32.mrb[0].mxu0
        %v651 = vadd.f32 0.0, %v650
        %v652 = vpop.f32.mrb[0].mxu0
        %653 = vmatprep.mubr.f32.mxu0 0.0
        %654 = vmatmul.mubr.f32.gmra.mrb[0].mxu0 %v267
        %v655 = vpop.f32.mrb[0].mxu0
        %v656 = vadd.f32 0.0, %v655
        %v657 = vpop.f32.mrb[0].mxu0
        %658 = vmatprep.mubr.f32.mxu0 0.0
        %659 = vmatmul.mubr.f32.gmra.mrb[0].mxu0 %v270
        %v660 = vpop.f32.mrb[0].mxu0
        %v661 = vadd.f32 0.0, %v660
        %v662 = vpop.f32.mrb[0].mxu0
        %663 = vmatprep.mubr.f32.mxu0 0.0
        %664 = vmatmul.mubr.f32.gmra.mrb[0].mxu0 %v273
        %v665 = vpop.f32.mrb[0].mxu0
        %v666 = vadd.f32 0.0, %v665
        %v667 = vpop.f32.mrb[0].mxu0
        %668 = vmatprep.mubr.f32.mxu0 0.0
        %669 = vmatmul.mubr.f32.gmra.mrb[0].mxu0 %v276
        %v670 = vpop.f32.mrb[0].mxu0
        %v671 = vadd.f32 0.0, %v670
        %v672 = vpop.f32.mrb[0].mxu0
        %673 = vmatprep.mubr.f32.mxu0 0.0
        %674 = vmatmul.mubr.f32.gmra.mrb[0].mxu0 %v279
        %v675 = vpop.f32.mrb[0].mxu0
        %v676 = vadd.f32 0.0, %v675
        %v677 = vpop.f32.mrb[0].mxu0
        %678 = vmatprep.mubr.f32.mxu0 0.0
        %679 = vmatmul.mubr.f32.gmra.mrb[0].mxu0 %v282
        %v680 = vpop.f32.mrb[0].mxu0
        %v681 = vadd.f32 0.0, %v680
        %v682 = vpop.f32.mrb[0].mxu0
        %683 = vmatprep.mubr.f32.mxu0 0.0
        %684 = vmatmul.mubr.f32.gmra.mrb[0].mxu0 %v285
        %v685 = vpop.f32.mrb[0].mxu0
        %v686 = vadd.f32 0.0, %v685
        %v687 = vpop.f32.mrb[0].mxu0
        %688 = vmatprep.mubr.f32.mxu0 0.0
        %689 = vmatmul.mubr.f32.gmra.mrb[0].mxu0 %v288
        %v690 = vpop.f32.mrb[0].mxu0
        %v691 = vadd.f32 0.0, %v690
        %v692 = vpop.f32.mrb[0].mxu0
        %693 = vmatprep.mubr.f32.mxu0 0.0
        %694 = vmatmul.mubr.f32.gmra.mrb[0].mxu0 %v291
        %v695 = vpop.f32.mrb[0].mxu0
        %v696 = vadd.f32 0.0, %v695
        %v697 = vpop.f32.mrb[0].mxu0
        %698 = vmatprep.mubr.f32.mxu0 0.0
        %699 = vmatmul.mubr.f32.gmra.mrb[0].mxu0 %v294
        %v700 = vpop.f32.mrb[0].mxu0
        %v701 = vadd.f32 0.0, %v700
        %v702 = vpop.f32.mrb[0].mxu0
        %703 = vmatprep.mubr.f32.mxu0 0.0
        %704 = vmatmul.mubr.f32.gmra.mrb[0].mxu0 %v297
        %v705 = vpop.f32.mrb[0].mxu0
        %v706 = vadd.f32 0.0, %v705
        %v707 = vpop.f32.mrb[0].mxu0
        %708 = vmatprep.mubr.f32.mxu0 0.0
        %709 = vmatmul.mubr.f32.gmra.mrb[0].mxu0 %v300
        %v710 = vpop.f32.mrb[0].mxu0
        %v711 = vadd.f32 0.0, %v710
        %v712 = vpop.f32.mrb[0].mxu0
        %713 = vmatprep.mubr.f32.mxu0 0.0
        %714 = vmatmul.mubr.f32.gmra.mrb[0].mxu0 %v303
        %v715 = vpop.f32.mrb[0].mxu0
        %v716 = vadd.f32 0.0, %v715
        %v717 = vpop.f32.mrb[0].mxu0
        %718 = vmatprep.mubr.f32.mxu0 0.0
        %719 = vmatmul.mubr.f32.gmra.mrb[0].mxu0 %v306
        %v720 = vpop.f32.mrb[0].mxu0
        %v721 = vadd.f32 0.0, %v720
        %v722 = vpop.f32.mrb[0].mxu0
        %723 = vmatprep.mubr.f32.mxu0 0.0
        %724 = vmatmul.mubr.f32.gmra.mrb[0].mxu0 %v309
        %v725 = vpop.f32.mrb[0].mxu0
        %v726 = vadd.f32 0.0, %v725
        %v727 = vpop.f32.mrb[0].mxu0
        %728 = vmatprep.mubr.f32.mxu0 0.0
        %729 = vmatmul.mubr.f32.gmra.mrb[0].mxu0 %v312
        %v730 = vpop.f32.mrb[0].mxu0
        %v731 = vadd.f32 0.0, %v730
        %v732 = vpop.f32.mrb[0].mxu0
        %733 = vmatprep.mubr.f32.mxu0 0.0
        %734 = vmatmul.mubr.f32.gmra.mrb[0].mxu0 %v315
        %v735 = vpop.f32.mrb[0].mxu0
        %v736 = vadd.f32 0.0, %v735
        %v737 = vpop.f32.mrb[0].mxu0
        %738 = vmatprep.mubr.f32.mxu0 0.0
        %739 = vmatmul.mubr.f32.gmra.mrb[0].mxu0 %v318
        %v740 = vpop.f32.mrb[0].mxu0
        %v741 = vadd.f32 0.0, %v740
        %v742 = vpop.f32.mrb[0].mxu0
        %743 = vmatprep.mubr.f32.mxu0 0.0
        %744 = vmatmul.mubr.f32.gmra.mrb[0].mxu0 %v321
        %v745 = vpop.f32.mrb[0].mxu0
        %v746 = vadd.f32 0.0, %v745
        %v747 = vpop.f32.mrb[0].mxu0
        %748 = vmatprep.mubr.f32.mxu0 0.0
        %749 = vmatmul.mubr.f32.gmra.mrb[0].mxu0 %v324
        %v750 = vpop.f32.mrb[0].mxu0
        %v751 = vadd.f32 0.0, %v750
        %v752 = vpop.f32.mrb[0].mxu0
        %753 = vmatprep.mubr.f32.mxu0 0.0
        %754 = vmatmul.mubr.f32.gmra.mrb[0].mxu0 %v327
        %v755 = vpop.f32.mrb[0].mxu0
        %v756 = vadd.f32 0.0, %v755
        %v757 = vpop.f32.mrb[0].mxu0
        %758 = vmatprep.mubr.f32.mxu0 0.0
        %759 = vmatmul.mubr.f32.gmra.mrb[0].mxu0 %v330
        %v760 = vpop.f32.mrb[0].mxu0
        %v761 = vadd.f32 0.0, %v760
        %v762 = vpop.f32.mrb[0].mxu0
        %763 = vmatprep.mubr.f32.mxu0 0.0
        %764 = vmatmul.mubr.f32.gmra.mrb[0].mxu0 %v333
        %v765 = vpop.f32.mrb[0].mxu0
        %v766 = vadd.f32 0.0, %v765
        %v767 = vpop.f32.mrb[0].mxu0
        %768 = vmatprep.mubr.f32.mxu0 0.0
        %769 = vmatmul.mubr.f32.gmra.mrb[0].mxu0 %v336
        %v770 = vpop.f32.mrb[0].mxu0
        %v771 = vadd.f32 0.0, %v770
        %v772 = vpop.f32.mrb[0].mxu0
        %773 = vmatprep.mubr.f32.mxu0 0.0
        %774 = vmatmul.mubr.f32.gmra.mrb[0].mxu0 %v339
        %v775 = vpop.f32.mrb[0].mxu0
        %v776 = vadd.f32 0.0, %v775
        %v777 = vpop.f32.mrb[0].mxu0
        %778 = vmatprep.mubr.f32.mxu0 0.0
        %779 = vmatmul.mubr.f32.gmra.mrb[0].mxu0 %v342
        %v780 = vpop.f32.mrb[0].mxu0
        %v781 = vadd.f32 0.0, %v780
        %v782 = vpop.f32.mrb[0].mxu0
        %783 = vmatprep.mubr.f32.mxu0 0.0
        %784 = vmatmul.mubr.f32.gmra.mrb[0].mxu0 %v345
        %v785 = vpop.f32.mrb[0].mxu0
        %v786 = vadd.f32 0.0, %v785
        %v787 = vpop.f32.mrb[0].mxu0
        %788 = vmatprep.mubr.f32.mxu0 0.0
        %789 = vmatmul.mubr.f32.gmra.mrb[0].mxu0 %v348
        %v790 = vpop.f32.mrb[0].mxu0
        %v791 = vadd.f32 0.0, %v790
        %v792 = vpop.f32.mrb[0].mxu0
        %793 = vmatprep.mubr.f32.mxu0 0.0
        %794 = vmatmul.mubr.f32.gmra.mrb[0].mxu0 %v351
        %v795 = vpop.f32.mrb[0].mxu0
        %v796 = vadd.f32 0.0, %v795
        %v797 = vpop.f32.mrb[0].mxu0
        %798 = vmatprep.mubr.f32.mxu0 0.0
        %799 = vmatmul.mubr.f32.gmra.mrb[0].mxu0 %v354
        %v800 = vpop.f32.mrb[0].mxu0
        %v801 = vadd.f32 0.0, %v800
        %v802 = vpop.f32.mrb[0].mxu0
        %803 = vmatprep.mubr.f32.mxu0 0.0
        %804 = vmatmul.mubr.f32.gmra.mrb[0].mxu0 %v357
        %v805 = vpop.f32.mrb[0].mxu0
        %v806 = vadd.f32 0.0, %v805
        %v807 = vpop.f32.mrb[0].mxu0
        %808 = vdwg.mxu0
        %v809 = vsel %vm262, %v426, -inf
        %810 = vmax.xlane.f32.xlu0 %v809
        %v811 = vpop.xlane.xlu0 %810
        %v812 = vsel %vm262, %v431, -inf
        %813 = vmax.xlane.f32.xlu0 %v812
        %v814 = vpop.xlane.xlu0 %813
        %v815 = vsel %vm262, %v436, -inf
        %816 = vmax.xlane.f32.xlu0 %v815
        %v817 = vpop.xlane.xlu0 %816
        %v818 = vsel %vm262, %v441, -inf
        %819 = vmax.xlane.f32.xlu0 %v818
        %v820 = vpop.xlane.xlu0 %819
        %v821 = vsel %vm262, %v446, -inf
        %822 = vmax.xlane.f32.xlu0 %v821
        %v823 = vpop.xlane.xlu0 %822
        %v824 = vsel %vm262, %v451, -inf
        %825 = vmax.xlane.f32.xlu0 %v824
        %v826 = vpop.xlane.xlu0 %825
        %v827 = vsel %vm262, %v456, -inf
        %828 = vmax.xlane.f32.xlu0 %v827
        %v829 = vpop.xlane.xlu0 %828
        %v830 = vsel %vm262, %v461, -inf
        %831 = vmax.xlane.f32.xlu0 %v830
        %v832 = vpop.xlane.xlu0 %831
        %v833 = vsel %vm262, %v466, -inf
        %834 = vmax.xlane.f32.xlu0 %v833
        %v835 = vpop.xlane.xlu0 %834
        %v836 = vsel %vm262, %v471, -inf
        %837 = vmax.xlane.f32.xlu0 %v836
        %v838 = vpop.xlane.xlu0 %837
        %v839 = vsel %vm262, %v476, -inf
        %840 = vmax.xlane.f32.xlu0 %v839
        %v841 = vpop.xlane.xlu0 %840
        %v842 = vsel %vm262, %v481, -inf
        %843 = vmax.xlane.f32.xlu0 %v842
        %v844 = vpop.xlane.xlu0 %843
        %v845 = vsel %vm262, %v486, -inf
        %846 = vmax.xlane.f32.xlu0 %v845
        %v847 = vpop.xlane.xlu0 %846
        %v848 = vsel %vm262, %v491, -inf
        %849 = vmax.xlane.f32.xlu0 %v848
        %v850 = vpop.xlane.xlu0 %849
        %v851 = vsel %vm262, %v496, -inf
        %852 = vmax.xlane.f32.xlu0 %v851
        %v853 = vpop.xlane.xlu0 %852
        %v854 = vsel %vm262, %v501, -inf
        %855 = vmax.xlane.f32.xlu0 %v854
        %v856 = vpop.xlane.xlu0 %855
        %v857 = vsel %vm262, %v506, -inf
        %858 = vmax.xlane.f32.xlu0 %v857
        %v859 = vpop.xlane.xlu0 %858
        %v860 = vsel %vm262, %v511, -inf
        %861 = vmax.xlane.f32.xlu0 %v860
        %v862 = vpop.xlane.xlu0 %861
        %v863 = vsel %vm262, %v516, -inf
        %864 = vmax.xlane.f32.xlu0 %v863
        %v865 = vpop.xlane.xlu0 %864
        %v866 = vsel %vm262, %v521, -inf
        %867 = vmax.xlane.f32.xlu0 %v866
        %v868 = vpop.xlane.xlu0 %867
        %v869 = vsel %vm262, %v526, -inf
        %870 = vmax.xlane.f32.xlu0 %v869
        %v871 = vpop.xlane.xlu0 %870
        %v872 = vsel %vm262, %v531, -inf
        %873 = vmax.xlane.f32.xlu0 %v872
        %v874 = vpop.xlane.xlu0 %873
        %v875 = vsel %vm262, %v536, -inf
        %876 = vmax.xlane.f32.xlu0 %v875
        %v877 = vpop.xlane.xlu0 %876
        %v878 = vsel %vm262, %v541, -inf
        %879 = vmax.xlane.f32.xlu0 %v878
        %v880 = vpop.xlane.xlu0 %879
        %v881 = vsel %vm262, %v546, -inf
        %882 = vmax.xlane.f32.xlu0 %v881
        %v883 = vpop.xlane.xlu0 %882
        %v884 = vsel %vm262, %v551, -inf
        %885 = vmax.xlane.f32.xlu0 %v884
        %v886 = vpop.xlane.xlu0 %885
        %v887 = vsel %vm262, %v556, -inf
        %888 = vmax.xlane.f32.xlu0 %v887
        %v889 = vpop.xlane.xlu0 %888
        %v890 = vsel %vm262, %v561, -inf
        %891 = vmax.xlane.f32.xlu0 %v890
        %v892 = vpop.xlane.xlu0 %891
        %v893 = vsel %vm262, %v566, -inf
        %894 = vmax.xlane.f32.xlu0 %v893
        %v895 = vpop.xlane.xlu0 %894
        %v896 = vsel %vm262, %v571, -inf
        %897 = vmax.xlane.f32.xlu0 %v896
        %v898 = vpop.xlane.xlu0 %897
        %v899 = vsel %vm262, %v576, -inf
        %900 = vmax.xlane.f32.xlu0 %v899
        %v901 = vpop.xlane.xlu0 %900
        %v902 = vsel %vm262, %v581, -inf
        %903 = vmax.xlane.f32.xlu0 %v902
        %v904 = vpop.xlane.xlu0 %903
        %v905 = vsub.f32 %v426, %v811
        %v906 = vsub.f32 %v431, %v814
        %v907 = vsub.f32 %v436, %v817
        %v908 = vsub.f32 %v441, %v820
        %v909 = vsub.f32 %v446, %v823
        %v910 = vsub.f32 %v451, %v826
        %v911 = vsub.f32 %v456, %v829
        %v912 = vsub.f32 %v461, %v832
        %v913 = vsub.f32 %v466, %v835
        %v914 = vsub.f32 %v471, %v838
        %v915 = vsub.f32 %v476, %v841
        %v916 = vsub.f32 %v481, %v844
        %v917 = vsub.f32 %v486, %v847
        %v918 = vsub.f32 %v491, %v850
        %v919 = vsub.f32 %v496, %v853
        %v920 = vsub.f32 %v501, %v856
        %v921 = vsub.f32 %v506, %v859
        %v922 = vsub.f32 %v511, %v862
        %v923 = vsub.f32 %v516, %v865
        %v924 = vsub.f32 %v521, %v868
        %v925 = vsub.f32 %v526, %v871
        %v926 = vsub.f32 %v531, %v874
        %v927 = vsub.f32 %v536, %v877
        %v928 = vsub.f32 %v541, %v880
        %v929 = vsub.f32 %v546, %v883
        %v930 = vsub.f32 %v551, %v886
        %v931 = vsub.f32 %v556, %v889
        %v932 = vsub.f32 %v561, %v892
        %v933 = vsub.f32 %v566, %v895
        %v934 = vsub.f32 %v571, %v898
        %v935 = vsub.f32 %v576, %v901
        %v936 = vsub.f32 %v581, %v904
        %v937 = vmul.f32 %v905, 1.442695
        %v938 = vpow.pop %v937
        %v939 = vmul.f32 %v906, 1.442695
        %v940 = vpow.pop %v939
        %v941 = vmul.f32 %v907, 1.442695
        %v942 = vpow.pop %v941
        %v943 = vmul.f32 %v908, 1.442695
        %v944 = vpow.pop %v943
        %v945 = vmul.f32 %v909, 1.442695
        %v946 = vpow.pop %v945
        %v947 = vmul.f32 %v910, 1.442695
        %v948 = vpow.pop %v947
        %v949 = vmul.f32 %v911, 1.442695
        %v950 = vpow.pop %v949
        %v951 = vmul.f32 %v912, 1.442695
        %v952 = vpow.pop %v951
        %v953 = vmul.f32 %v913, 1.442695
        %v954 = vpow.pop %v953
        %v955 = vmul.f32 %v914, 1.442695
        %v956 = vpow.pop %v955
        %v957 = vmul.f32 %v915, 1.442695
        %v958 = vpow.pop %v957
        %v959 = vmul.f32 %v916, 1.442695
        %v960 = vpow.pop %v959
        %v961 = vmul.f32 %v917, 1.442695
        %v962 = vpow.pop %v961
        %v963 = vmul.f32 %v918, 1.442695
        %v964 = vpow.pop %v963
        %v965 = vmul.f32 %v919, 1.442695
        %v966 = vpow.pop %v965
        %v967 = vmul.f32 %v920, 1.442695
        %v968 = vpow.pop %v967
        %v969 = vmul.f32 %v921, 1.442695
        %v970 = vpow.pop %v969
        %v971 = vmul.f32 %v922, 1.442695
        %v972 = vpow.pop %v971
        %v973 = vmul.f32 %v923, 1.442695
        %v974 = vpow.pop %v973
        %v975 = vmul.f32 %v924, 1.442695
        %v976 = vpow.pop %v975
        %v977 = vmul.f32 %v925, 1.442695
        %v978 = vpow.pop %v977
        %v979 = vmul.f32 %v926, 1.442695
        %v980 = vpow.pop %v979
        %v981 = vmul.f32 %v927, 1.442695
        %v982 = vpow.pop %v981
        %v983 = vmul.f32 %v928, 1.442695
        %v984 = vpow.pop %v983
        %v985 = vmul.f32 %v929, 1.442695
        %v986 = vpow.pop %v985
        %v987 = vmul.f32 %v930, 1.442695
        %v988 = vpow.pop %v987
        %v989 = vmul.f32 %v931, 1.442695
        %v990 = vpow.pop %v989
        %v991 = vmul.f32 %v932, 1.442695
        %v992 = vpow.pop %v991
        %v993 = vmul.f32 %v933, 1.442695
        %v994 = vpow.pop %v993
        %v995 = vmul.f32 %v934, 1.442695
        %v996 = vpow.pop %v995
        %v997 = vmul.f32 %v935, 1.442695
        %v998 = vpow.pop %v997
        %v999 = vmul.f32 %v936, 1.442695
        %v1000 = vpow.pop %v999
        %v1001 = vsel %vm262, %v938, 0.0
        %1002 = vadd.xlane.f32.xlu0 %v1001
        %v1003 = vpop.xlane.xlu0 %1002
        %v1004 = vsel %vm262, %v940, 0.0
        %1005 = vadd.xlane.f32.xlu0 %v1004
        %v1006 = vpop.xlane.xlu0 %1005
        %v1007 = vsel %vm262, %v942, 0.0
        %1008 = vadd.xlane.f32.xlu0 %v1007
        %v1009 = vpop.xlane.xlu0 %1008
        %v1010 = vsel %vm262, %v944, 0.0
        %1011 = vadd.xlane.f32.xlu0 %v1010
        %v1012 = vpop.xlane.xlu0 %1011
        %v1013 = vsel %vm262, %v946, 0.0
        %1014 = vadd.xlane.f32.xlu0 %v1013
        %v1015 = vpop.xlane.xlu0 %1014
        %v1016 = vsel %vm262, %v948, 0.0
        %1017 = vadd.xlane.f32.xlu0 %v1016
        %v1018 = vpop.xlane.xlu0 %1017
        %v1019 = vsel %vm262, %v950, 0.0
        %1020 = vadd.xlane.f32.xlu0 %v1019
        %v1021 = vpop.xlane.xlu0 %1020
        %v1022 = vsel %vm262, %v952, 0.0
        %1023 = vadd.xlane.f32.xlu0 %v1022
        %v1024 = vpop.xlane.xlu0 %1023
        %v1025 = vsel %vm262, %v954, 0.0
        %1026 = vadd.xlane.f32.xlu0 %v1025
        %v1027 = vpop.xlane.xlu0 %1026
        %v1028 = vsel %vm262, %v956, 0.0
        %1029 = vadd.xlane.f32.xlu0 %v1028
        %v1030 = vpop.xlane.xlu0 %1029
        %v1031 = vsel %vm262, %v958, 0.0
        %1032 = vadd.xlane.f32.xlu0 %v1031
        %v1033 = vpop.xlane.xlu0 %1032
        %v1034 = vsel %vm262, %v960, 0.0
        %1035 = vadd.xlane.f32.xlu0 %v1034
        %v1036 = vpop.xlane.xlu0 %1035
        %v1037 = vsel %vm262, %v962, 0.0
        %1038 = vadd.xlane.f32.xlu0 %v1037
        %v1039 = vpop.xlane.xlu0 %1038
        %v1040 = vsel %vm262, %v964, 0.0
        %1041 = vadd.xlane.f32.xlu0 %v1040
        %v1042 = vpop.xlane.xlu0 %1041
        %v1043 = vsel %vm262, %v966, 0.0
        %1044 = vadd.xlane.f32.xlu0 %v1043
        %v1045 = vpop.xlane.xlu0 %1044
        %v1046 = vsel %vm262, %v968, 0.0
        %1047 = vadd.xlane.f32.xlu0 %v1046
        %v1048 = vpop.xlane.xlu0 %1047
        %v1049 = vsel %vm262, %v970, 0.0
        %1050 = vadd.xlane.f32.xlu0 %v1049
        %v1051 = vpop.xlane.xlu0 %1050
        %v1052 = vsel %vm262, %v972, 0.0
        %1053 = vadd.xlane.f32.xlu0 %v1052
        %v1054 = vpop.xlane.xlu0 %1053
        %v1055 = vsel %vm262, %v974, 0.0
        %1056 = vadd.xlane.f32.xlu0 %v1055
        %v1057 = vpop.xlane.xlu0 %1056
        %v1058 = vsel %vm262, %v976, 0.0
        %1059 = vadd.xlane.f32.xlu0 %v1058
        %v1060 = vpop.xlane.xlu0 %1059
        %v1061 = vsel %vm262, %v978, 0.0
        %1062 = vadd.xlane.f32.xlu0 %v1061
        %v1063 = vpop.xlane.xlu0 %1062
        %v1064 = vsel %vm262, %v980, 0.0
        %1065 = vadd.xlane.f32.xlu0 %v1064
        %v1066 = vpop.xlane.xlu0 %1065
        %v1067 = vsel %vm262, %v982, 0.0
        %1068 = vadd.xlane.f32.xlu0 %v1067
        %v1069 = vpop.xlane.xlu0 %1068
        %v1070 = vsel %vm262, %v984, 0.0
        %1071 = vadd.xlane.f32.xlu0 %v1070
        %v1072 = vpop.xlane.xlu0 %1071
        %v1073 = vsel %vm262, %v986, 0.0
        %1074 = vadd.xlane.f32.xlu0 %v1073
        %v1075 = vpop.xlane.xlu0 %1074
        %v1076 = vsel %vm262, %v988, 0.0
        %1077 = vadd.xlane.f32.xlu0 %v1076
        %v1078 = vpop.xlane.xlu0 %1077
        %v1079 = vsel %vm262, %v990, 0.0
        %1080 = vadd.xlane.f32.xlu0 %v1079
        %v1081 = vpop.xlane.xlu0 %1080
        %v1082 = vsel %vm262, %v992, 0.0
        %1083 = vadd.xlane.f32.xlu0 %v1082
        %v1084 = vpop.xlane.xlu0 %1083
        %v1085 = vsel %vm262, %v994, 0.0
        %1086 = vadd.xlane.f32.xlu0 %v1085
        %v1087 = vpop.xlane.xlu0 %1086
        %v1088 = vsel %vm262, %v996, 0.0
        %1089 = vadd.xlane.f32.xlu0 %v1088
        %v1090 = vpop.xlane.xlu0 %1089
        %v1091 = vsel %vm262, %v998, 0.0
        %1092 = vadd.xlane.f32.xlu0 %v1091
        %v1093 = vpop.xlane.xlu0 %1092
        %v1094 = vsel %vm262, %v1000, 0.0
        %1095 = vadd.xlane.f32.xlu0 %v1094
        %v1096 = vpop.xlane.xlu0 %1095
        %v1097 = vrcp.pop %v1003
        %v1098 = vrcp.pop %v1006
        %v1099 = vrcp.pop %v1009
        %v1100 = vrcp.pop %v1012
        %v1101 = vrcp.pop %v1015
        %v1102 = vrcp.pop %v1018
        %v1103 = vrcp.pop %v1021
        %v1104 = vrcp.pop %v1024
        %v1105 = vrcp.pop %v1027
        %v1106 = vrcp.pop %v1030
        %v1107 = vrcp.pop %v1033
        %v1108 = vrcp.pop %v1036
        %v1109 = vrcp.pop %v1039
        %v1110 = vrcp.pop %v1042
        %v1111 = vrcp.pop %v1045
        %v1112 = vrcp.pop %v1048
        %v1113 = vrcp.pop %v1051
        %v1114 = vrcp.pop %v1054
        %v1115 = vrcp.pop %v1057
        %v1116 = vrcp.pop %v1060
        %v1117 = vrcp.pop %v1063
        %v1118 = vrcp.pop %v1066
        %v1119 = vrcp.pop %v1069
        %v1120 = vrcp.pop %v1072
        %v1121 = vrcp.pop %v1075
        %v1122 = vrcp.pop %v1078
        %v1123 = vrcp.pop %v1081
        %v1124 = vrcp.pop %v1084
        %v1125 = vrcp.pop %v1087
        %v1126 = vrcp.pop %v1090
        %v1127 = vrcp.pop %v1093
        %v1128 = vrcp.pop %v1096
        %v1129 = vmul.f32 %v938, %v1097
        %v1130 = vmul.f32 %v940, %v1098
        %v1131 = vmul.f32 %v942, %v1099
        %v1132 = vmul.f32 %v944, %v1100
        %v1133 = vmul.f32 %v946, %v1101
        %v1134 = vmul.f32 %v948, %v1102
        %v1135 = vmul.f32 %v950, %v1103
        %v1136 = vmul.f32 %v952, %v1104
        %v1137 = vmul.f32 %v954, %v1105
        %v1138 = vmul.f32 %v956, %v1106
        %v1139 = vmul.f32 %v958, %v1107
        %v1140 = vmul.f32 %v960, %v1108
        %v1141 = vmul.f32 %v962, %v1109
        %v1142 = vmul.f32 %v964, %v1110
        %v1143 = vmul.f32 %v966, %v1111
        %v1144 = vmul.f32 %v968, %v1112
        %v1145 = vmul.f32 %v970, %v1113
        %v1146 = vmul.f32 %v972, %v1114
        %v1147 = vmul.f32 %v974, %v1115
        %v1148 = vmul.f32 %v976, %v1116
        %v1149 = vmul.f32 %v978, %v1117
        %v1150 = vmul.f32 %v980, %v1118
        %v1151 = vmul.f32 %v982, %v1119
        %v1152 = vmul.f32 %v984, %v1120
        %v1153 = vmul.f32 %v986, %v1121
        %v1154 = vmul.f32 %v988, %v1122
        %v1155 = vmul.f32 %v990, %v1123
        %v1156 = vmul.f32 %v992, %v1124
        %v1157 = vmul.f32 %v994, %v1125
        %v1158 = vmul.f32 %v996, %v1126
        %v1159 = vmul.f32 %v998, %v1127
        %v1160 = vmul.f32 %v1000, %v1128
        %v1162 = vsel %vm262, %v1129, 0
        %v1165 = vsel %vm262, %v1130, 0
        %v1168 = vsel %vm262, %v1131, 0
        %v1171 = vsel %vm262, %v1132, 0
        %v1174 = vsel %vm262, %v1133, 0
        %v1177 = vsel %vm262, %v1134, 0
        %v1180 = vsel %vm262, %v1135, 0
        %v1183 = vsel %vm262, %v1136, 0
        %v1186 = vsel %vm262, %v1137, 0
        %v1189 = vsel %vm262, %v1138, 0
        %v1192 = vsel %vm262, %v1139, 0
        %v1195 = vsel %vm262, %v1140, 0
        %v1198 = vsel %vm262, %v1141, 0
        %v1201 = vsel %vm262, %v1142, 0
        %v1204 = vsel %vm262, %v1143, 0
        %v1207 = vsel %vm262, %v1144, 0
        %v1210 = vsel %vm262, %v1145, 0
        %v1213 = vsel %vm262, %v1146, 0
        %v1216 = vsel %vm262, %v1147, 0
        %v1219 = vsel %vm262, %v1148, 0
        %v1222 = vsel %vm262, %v1149, 0
        %v1225 = vsel %vm262, %v1150, 0
        %v1228 = vsel %vm262, %v1151, 0
        %v1231 = vsel %vm262, %v1152, 0
        %v1234 = vsel %vm262, %v1153, 0
        %v1237 = vsel %vm262, %v1154, 0
        %v1240 = vsel %vm262, %v1155, 0
        %v1243 = vsel %vm262, %v1156, 0
        %v1246 = vsel %vm262, %v1157, 0
        %v1249 = vsel %vm262, %v1158, 0
        %v1252 = vsel %vm262, %v1159, 0
        %v1255 = vsel %vm262, %v1160, 0
        %1257 = vmatprep.subr.mxu0 0.0
        %1258 = vmatpush1.msra.mxu0 %v257
        %1259 = vmatprep.subr.mxu0 0.0
        %1260 = vmatpush1.msra.mxu0 0.0
        %1261 = vmatprep.subr.mxu0 0.0
        %1262 = vmatpush1.msra.mxu0 0.0
        %1263 = vmatprep.subr.mxu0 0.0
        %1264 = vmatpush1.msra.mxu0 0.0
        %1265 = vmatprep.subr.mxu0 0.0
        %1266 = vmatpush1.msra.mxu0 0.0
        %1267 = vmatprep.subr.mxu0 0.0
        %1268 = vmatpush1.msra.mxu0 0.0
        %1269 = vmatprep.subr.mxu0 0.0
        %1270 = vmatpush1.msra.mxu0 0.0
        %1271 = vmatprep.subr.mxu0 0.0
        %1272 = vmatpush1.msra.mxu0 0.0
        %1273 = vmatprep.subr.mxu0 0.0
        %1274 = vmatpush1.msra.mxu0 0.0
        %1275 = vmatprep.subr.mxu0 0.0
        %1276 = vmatpush1.msra.mxu0 0.0
        %1277 = vmatprep.subr.mxu0 0.0
        %1278 = vmatpush1.msra.mxu0 0.0
        %1279 = vmatprep.subr.mxu0 0.0
        %1280 = vmatpush1.msra.mxu0 0.0
        %1281 = vmatprep.subr.mxu0 0.0
        %1282 = vmatpush1.msra.mxu0 0.0
        %1283 = vmatprep.subr.mxu0 0.0
        %1284 = vmatpush1.msra.mxu0 0.0
        %1285 = vmatprep.subr.mxu0 0.0
        %1286 = vmatpush1.msra.mxu0 0.0
        %1287 = vmatprep.subr.mxu0 0.0
        %1288 = vmatpush1.msra.mxu0 0.0
        %1289 = vmatprep.subr.mxu0 0.0
        %1290 = vmatpush1.msra.mxu0 0.0
        %1291 = vmatprep.subr.mxu0 0.0
        %1292 = vmatpush1.msra.mxu0 0.0
        %1293 = vmatprep.subr.mxu0 0.0
        %1294 = vmatpush1.msra.mxu0 0.0
        %1295 = vmatprep.subr.mxu0 0.0
        %1296 = vmatpush1.msra.mxu0 0.0
        %1297 = vmatprep.subr.mxu0 0.0
        %1298 = vmatpush1.msra.mxu0 0.0
        %1299 = vmatprep.subr.mxu0 0.0
        %1300 = vmatpush1.msra.mxu0 0.0
        %1301 = vmatprep.subr.mxu0 0.0
        %1302 = vmatpush1.msra.mxu0 0.0
        %1303 = vmatprep.subr.mxu0 0.0
        %1304 = vmatpush1.msra.mxu0 0.0
        %1305 = vmatprep.subr.mxu0 0.0
        %1306 = vmatpush1.msra.mxu0 0.0
        %1307 = vmatprep.subr.mxu0 0.0
        %1308 = vmatpush1.msra.mxu0 0.0
        %1309 = vmatprep.subr.mxu0 0.0
        %1310 = vmatpush1.msra.mxu0 0.0
        %1311 = vmatprep.subr.mxu0 0.0
        %1312 = vmatpush1.msra.mxu0 0.0
        %1313 = vmatprep.subr.mxu0 0.0
        %1314 = vmatpush1.msra.mxu0 0.0
        %1315 = vmatprep.subr.mxu0 0.0
        %1316 = vmatpush1.msra.mxu0 0.0
        %1317 = vmatprep.subr.mxu0 0.0
        %1318 = vmatpush1.msra.mxu0 0.0
        %1319 = vmatprep.subr.mxu0 0.0
        %1320 = vmatpush1.msra.mxu0 0.0
        %1321 = vmatprep.mubr.f32.mxu0 0.0
        %1322 = vmatmul.mubr.f32.gmra.mrb[0].mxu0 %v1162
        %v1323 = vpop.f32.mrb[0].mxu0
        %v1324 = vadd.f32 0.0, %v1323
        %v1325 = vpop.f32.mrb[0].mxu0
        %1326 = vmatprep.mubr.f32.mxu0 0.0
        %1327 = vmatmul.mubr.f32.gmra.mrb[0].mxu0 %v1165
        %v1328 = vpop.f32.mrb[0].mxu0
        %v1329 = vadd.f32 0.0, %v1328
        %v1330 = vpop.f32.mrb[0].mxu0
        %1331 = vmatprep.mubr.f32.mxu0 0.0
        %1332 = vmatmul.mubr.f32.gmra.mrb[0].mxu0 %v1168
        %v1333 = vpop.f32.mrb[0].mxu0
        %v1334 = vadd.f32 0.0, %v1333
        %v1335 = vpop.f32.mrb[0].mxu0
        %1336 = vmatprep.mubr.f32.mxu0 0.0
        %1337 = vmatmul.mubr.f32.gmra.mrb[0].mxu0 %v1171
        %v1338 = vpop.f32.mrb[0].mxu0
        %v1339 = vadd.f32 0.0, %v1338
        %v1340 = vpop.f32.mrb[0].mxu0
        %1341 = vmatprep.mubr.f32.mxu0 0.0
        %1342 = vmatmul.mubr.f32.gmra.mrb[0].mxu0 %v1174
        %v1343 = vpop.f32.mrb[0].mxu0
        %v1344 = vadd.f32 0.0, %v1343
        %v1345 = vpop.f32.mrb[0].mxu0
        %1346 = vmatprep.mubr.f32.mxu0 0.0
        %1347 = vmatmul.mubr.f32.gmra.mrb[0].mxu0 %v1177
        %v1348 = vpop.f32.mrb[0].mxu0
        %v1349 = vadd.f32 0.0, %v1348
        %v1350 = vpop.f32.mrb[0].mxu0
        %1351 = vmatprep.mubr.f32.mxu0 0.0
        %1352 = vmatmul.mubr.f32.gmra.mrb[0].mxu0 %v1180
        %v1353 = vpop.f32.mrb[0].mxu0
        %v1354 = vadd.f32 0.0, %v1353
        %v1355 = vpop.f32.mrb[0].mxu0
        %1356 = vmatprep.mubr.f32.mxu0 0.0
        %1357 = vmatmul.mubr.f32.gmra.mrb[0].mxu0 %v1183
        %v1358 = vpop.f32.mrb[0].mxu0
        %v1359 = vadd.f32 0.0, %v1358
        %v1360 = vpop.f32.mrb[0].mxu0
        %1361 = vmatprep.mubr.f32.mxu0 0.0
        %1362 = vmatmul.mubr.f32.gmra.mrb[0].mxu0 %v1186
        %v1363 = vpop.f32.mrb[0].mxu0
        %v1364 = vadd.f32 0.0, %v1363
        %v1365 = vpop.f32.mrb[0].mxu0
        %1366 = vmatprep.mubr.f32.mxu0 0.0
        %1367 = vmatmul.mubr.f32.gmra.mrb[0].mxu0 %v1189
        %v1368 = vpop.f32.mrb[0].mxu0
        %v1369 = vadd.f32 0.0, %v1368
        %v1370 = vpop.f32.mrb[0].mxu0
        %1371 = vmatprep.mubr.f32.mxu0 0.0
        %1372 = vmatmul.mubr.f32.gmra.mrb[0].mxu0 %v1192
        %v1373 = vpop.f32.mrb[0].mxu0
        %v1374 = vadd.f32 0.0, %v1373
        %v1375 = vpop.f32.mrb[0].mxu0
        %1376 = vmatprep.mubr.f32.mxu0 0.0
        %1377 = vmatmul.mubr.f32.gmra.mrb[0].mxu0 %v1195
        %v1378 = vpop.f32.mrb[0].mxu0
        %v1379 = vadd.f32 0.0, %v1378
        %v1380 = vpop.f32.mrb[0].mxu0
        %1381 = vmatprep.mubr.f32.mxu0 0.0
        %1382 = vmatmul.mubr.f32.gmra.mrb[0].mxu0 %v1198
        %v1383 = vpop.f32.mrb[0].mxu0
        %v1384 = vadd.f32 0.0, %v1383
        %v1385 = vpop.f32.mrb[0].mxu0
        %1386 = vmatprep.mubr.f32.mxu0 0.0
        %1387 = vmatmul.mubr.f32.gmra.mrb[0].mxu0 %v1201
        %v1388 = vpop.f32.mrb[0].mxu0
        %v1389 = vadd.f32 0.0, %v1388
        %v1390 = vpop.f32.mrb[0].mxu0
        %1391 = vmatprep.mubr.f32.mxu0 0.0
        %1392 = vmatmul.mubr.f32.gmra.mrb[0].mxu0 %v1204
        %v1393 = vpop.f32.mrb[0].mxu0
        %v1394 = vadd.f32 0.0, %v1393
        %v1395 = vpop.f32.mrb[0].mxu0
        %1396 = vmatprep.mubr.f32.mxu0 0.0
        %1397 = vmatmul.mubr.f32.gmra.mrb[0].mxu0 %v1207
        %v1398 = vpop.f32.mrb[0].mxu0
        %v1399 = vadd.f32 0.0, %v1398
        %v1400 = vpop.f32.mrb[0].mxu0
        %1401 = vmatprep.mubr.f32.mxu0 0.0
        %1402 = vmatmul.mubr.f32.gmra.mrb[0].mxu0 %v1210
        %v1403 = vpop.f32.mrb[0].mxu0
        %v1404 = vadd.f32 0.0, %v1403
        %v1405 = vpop.f32.mrb[0].mxu0
        %1406 = vmatprep.mubr.f32.mxu0 0.0
        %1407 = vmatmul.mubr.f32.gmra.mrb[0].mxu0 %v1213
        %v1408 = vpop.f32.mrb[0].mxu0
        %v1409 = vadd.f32 0.0, %v1408
        %v1410 = vpop.f32.mrb[0].mxu0
        %1411 = vmatprep.mubr.f32.mxu0 0.0
        %1412 = vmatmul.mubr.f32.gmra.mrb[0].mxu0 %v1216
        %v1413 = vpop.f32.mrb[0].mxu0
        %v1414 = vadd.f32 0.0, %v1413
        %v1415 = vpop.f32.mrb[0].mxu0
        %1416 = vmatprep.mubr.f32.mxu0 0.0
        %1417 = vmatmul.mubr.f32.gmra.mrb[0].mxu0 %v1219
        %v1418 = vpop.f32.mrb[0].mxu0
        %v1419 = vadd.f32 0.0, %v1418
        %v1420 = vpop.f32.mrb[0].mxu0
        %1421 = vmatprep.mubr.f32.mxu0 0.0
        %1422 = vmatmul.mubr.f32.gmra.mrb[0].mxu0 %v1222
        %v1423 = vpop.f32.mrb[0].mxu0
        %v1424 = vadd.f32 0.0, %v1423
        %v1425 = vpop.f32.mrb[0].mxu0
        %1426 = vmatprep.mubr.f32.mxu0 0.0
        %1427 = vmatmul.mubr.f32.gmra.mrb[0].mxu0 %v1225
        %v1428 = vpop.f32.mrb[0].mxu0
        %v1429 = vadd.f32 0.0, %v1428
        %v1430 = vpop.f32.mrb[0].mxu0
        %1431 = vmatprep.mubr.f32.mxu0 0.0
        %1432 = vmatmul.mubr.f32.gmra.mrb[0].mxu0 %v1228
        %v1433 = vpop.f32.mrb[0].mxu0
        %v1434 = vadd.f32 0.0, %v1433
        %v1435 = vpop.f32.mrb[0].mxu0
        %1436 = vmatprep.mubr.f32.mxu0 0.0
        %1437 = vmatmul.mubr.f32.gmra.mrb[0].mxu0 %v1231
        %v1438 = vpop.f32.mrb[0].mxu0
        %v1439 = vadd.f32 0.0, %v1438
        %v1440 = vpop.f32.mrb[0].mxu0
        %1441 = vmatprep.mubr.f32.mxu0 0.0
        %1442 = vmatmul.mubr.f32.gmra.mrb[0].mxu0 %v1234
        %v1443 = vpop.f32.mrb[0].mxu0
        %v1444 = vadd.f32 0.0, %v1443
        %v1445 = vpop.f32.mrb[0].mxu0
        %1446 = vmatprep.mubr.f32.mxu0 0.0
        %1447 = vmatmul.mubr.f32.gmra.mrb[0].mxu0 %v1237
        %v1448 = vpop.f32.mrb[0].mxu0
        %v1449 = vadd.f32 0.0, %v1448
        %v1450 = vpop.f32.mrb[0].mxu0
        %1451 = vmatprep.mubr.f32.mxu0 0.0
        %1452 = vmatmul.mubr.f32.gmra.mrb[0].mxu0 %v1240
        %v1453 = vpop.f32.mrb[0].mxu0
        %v1454 = vadd.f32 0.0, %v1453
        %v1455 = vpop.f32.mrb[0].mxu0
        %1456 = vmatprep.mubr.f32.mxu0 0.0
        %1457 = vmatmul.mubr.f32.gmra.mrb[0].mxu0 %v1243
        %v1458 = vpop.f32.mrb[0].mxu0
        %v1459 = vadd.f32 0.0, %v1458
        %v1460 = vpop.f32.mrb[0].mxu0
        %1461 = vmatprep.mubr.f32.mxu0 0.0
        %1462 = vmatmul.mubr.f32.gmra.mrb[0].mxu0 %v1246
        %v1463 = vpop.f32.mrb[0].mxu0
        %v1464 = vadd.f32 0.0, %v1463
        %v1465 = vpop.f32.mrb[0].mxu0
        %1466 = vmatprep.mubr.f32.mxu0 0.0
        %1467 = vmatmul.mubr.f32.gmra.mrb[0].mxu0 %v1249
        %v1468 = vpop.f32.mrb[0].mxu0
        %v1469 = vadd.f32 0.0, %v1468
        %v1470 = vpop.f32.mrb[0].mxu0
        %1471 = vmatprep.mubr.f32.mxu0 0.0
        %1472 = vmatmul.mubr.f32.gmra.mrb[0].mxu0 %v1252
        %v1473 = vpop.f32.mrb[0].mxu0
        %v1474 = vadd.f32 0.0, %v1473
        %v1475 = vpop.f32.mrb[0].mxu0
        %1476 = vmatprep.mubr.f32.mxu0 0.0
        %1477 = vmatmul.mubr.f32.gmra.mrb[0].mxu0 %v1255
        %v1478 = vpop.f32.mrb[0].mxu0
        %v1479 = vadd.f32 0.0, %v1478
        %v1480 = vpop.f32.mrb[0].mxu0
        %1481 = vdwg.mxu0
        %v1482 = vmul.f32 %v651, %v1324
        %v1483 = vmul.f32 %v656, %v1329
        %v1484 = vmul.f32 %v661, %v1334
        %v1485 = vmul.f32 %v666, %v1339
        %v1486 = vmul.f32 %v671, %v1344
        %v1487 = vmul.f32 %v676, %v1349
        %v1488 = vmul.f32 %v681, %v1354
        %v1489 = vmul.f32 %v686, %v1359
        %v1490 = vmul.f32 %v691, %v1364
        %v1491 = vmul.f32 %v696, %v1369
        %v1492 = vmul.f32 %v701, %v1374
        %v1493 = vmul.f32 %v706, %v1379
        %v1494 = vmul.f32 %v711, %v1384
        %v1495 = vmul.f32 %v716, %v1389
        %v1496 = vmul.f32 %v721, %v1394
        %v1497 = vmul.f32 %v726, %v1399
        %v1498 = vmul.f32 %v731, %v1404
        %v1499 = vmul.f32 %v736, %v1409
        %v1500 = vmul.f32 %v741, %v1414
        %v1501 = vmul.f32 %v746, %v1419
        %v1502 = vmul.f32 %v751, %v1424
        %v1503 = vmul.f32 %v756, %v1429
        %v1504 = vmul.f32 %v761, %v1434
        %v1505 = vmul.f32 %v766, %v1439
        %v1506 = vmul.f32 %v771, %v1444
        %v1507 = vmul.f32 %v776, %v1449
        %v1508 = vmul.f32 %v781, %v1454
        %v1509 = vmul.f32 %v786, %v1459
        %v1510 = vmul.f32 %v791, %v1464
        %v1511 = vmul.f32 %v796, %v1469
        %v1512 = vmul.f32 %v801, %v1474
        %v1513 = vmul.f32 %v806, %v1479
        %1514 = vmatprep.subr.mxu0 0.0
        %1515 = vmatpush1.msra.mxu0 %v1482
        %1516 = vmatprep.subr.mxu0 0.0
        %1517 = vmatpush1.msra.mxu0 %v1483
        %1518 = vmatprep.subr.mxu0 0.0
        %1519 = vmatpush1.msra.mxu0 %v1484
        %1520 = vmatprep.subr.mxu0 0.0
        %1521 = vmatpush1.msra.mxu0 %v1485
        %1522 = vmatprep.subr.mxu0 0.0
        %1523 = vmatpush1.msra.mxu0 %v1486
        %1524 = vmatprep.subr.mxu0 0.0
        %1525 = vmatpush1.msra.mxu0 %v1487
        %1526 = vmatprep.subr.mxu0 0.0
        %1527 = vmatpush1.msra.mxu0 %v1488
        %1528 = vmatprep.subr.mxu0 0.0
        %1529 = vmatpush1.msra.mxu0 %v1489
        %1530 = vmatprep.subr.mxu0 0.0
        %1531 = vmatpush1.msra.mxu0 %v1490
        %1532 = vmatprep.subr.mxu0 0.0
        %1533 = vmatpush1.msra.mxu0 %v1491
        %1534 = vmatprep.subr.mxu0 0.0
        %1535 = vmatpush1.msra.mxu0 %v1492
        %1536 = vmatprep.subr.mxu0 0.0
        %1537 = vmatpush1.msra.mxu0 %v1493
        %1538 = vmatprep.subr.mxu0 0.0
        %1539 = vmatpush1.msra.mxu0 %v1494
        %1540 = vmatprep.subr.mxu0 0.0
        %1541 = vmatpush1.msra.mxu0 %v1495
        %1542 = vmatprep.subr.mxu0 0.0
        %1543 = vmatpush1.msra.mxu0 %v1496
        %1544 = vmatprep.subr.mxu0 0.0
        %1545 = vmatpush1.msra.mxu0 %v1497
        %1546 = vmatprep.subr.mxu0 0.0
        %1547 = vmatpush1.msra.mxu0 %v1498
        %1548 = vmatprep.subr.mxu0 0.0
        %1549 = vmatpush1.msra.mxu0 %v1499
        %1550 = vmatprep.subr.mxu0 0.0
        %1551 = vmatpush1.msra.mxu0 %v1500
        %1552 = vmatprep.subr.mxu0 0.0
        %1553 = vmatpush1.msra.mxu0 %v1501
        %1554 = vmatprep.subr.mxu0 0.0
        %1555 = vmatpush1.msra.mxu0 %v1502
        %1556 = vmatprep.subr.mxu0 0.0
        %1557 = vmatpush1.msra.mxu0 %v1503
        %1558 = vmatprep.subr.mxu0 0.0
        %1559 = vmatpush1.msra.mxu0 %v1504
        %1560 = vmatprep.subr.mxu0 0.0
        %1561 = vmatpush1.msra.mxu0 %v1505
        %1562 = vmatprep.subr.mxu0 0.0
        %1563 = vmatpush1.msra.mxu0 %v1506
        %1564 = vmatprep.subr.mxu0 0.0
        %1565 = vmatpush1.msra.mxu0 %v1507
        %1566 = vmatprep.subr.mxu0 0.0
        %1567 = vmatpush1.msra.mxu0 %v1508
        %1568 = vmatprep.subr.mxu0 0.0
        %1569 = vmatpush1.msra.mxu0 %v1509
        %1570 = vmatprep.subr.mxu0 0.0
        %1571 = vmatpush1.msra.mxu0 %v1510
        %1572 = vmatprep.subr.mxu0 0.0
        %1573 = vmatpush1.msra.mxu0 %v1511
        %1574 = vmatprep.subr.mxu0 0.0
        %1575 = vmatpush1.msra.mxu0 %v1512
        %1576 = vmatprep.subr.mxu0 0.0
        %1577 = vmatpush1.msra.mxu0 %v1513
        %1578 = vmatprep.mubr.f32.mxu0 %v259
        %1579 = vmatmul.mubr.f32.gmra.mrb[0].mxu0 %v258
        %v1580 = vpop.f32.mrb[0].mxu0
        %v1581 = vadd.f32 0.0, %v1580
        %v1582 = vpop.f32.mrb[0].mxu0
        %1583 = vmatprep.mubr.f32.mxu0 %v261
        %1584 = vmatmul.mubr.f32.gmra.mrb[0].mxu0 %v260
        %v1585 = vpop.f32.mrb[0].mxu0
        %v1586 = vadd.f32 0.0, %v1585
        %v1587 = vpop.f32.mrb[0].mxu0
        %1588 = vdwg.mxu0
        %1589 = vst [vmem:[%s217] sm:$0xff] %v1581
        %1590 = vst [vmem:[%s217 + $0x8] sm:$0xff] %v1586
        %s1591 = sand.u32 %s137, 1
        %s1592 = scalar_lea.sflag [#allocation3], %s1591
        %s1593 = sand.u32 %s137, 1
        %s1594 = smul.addr %s1593, 16
        %s1595 = scalar_lea.vmem [#allocation2], %s1594
        // Predicated region
        $region41: #{tpu_custom_call.1} parent=39 // pred_check
          %p1596 = pneg %p147
        $region42: #{tpu_custom_call.1} parent=39 // pred_check_branch
          %1598 = sbr.rel (%p1596) target = $region44
        $region43: #{tpu_custom_call.1} parent=39 // pred_region
          %s1600 = ssub.s32 256, 256
          %1601 = vsyncadd %s1592, %s1600
          %s1602 = smul.addr %s19, 2
          %s1603 = smul.addr %s1602, 128
          %s1604 = scalar_lea.hbm %s5, %s1603
          %s1605 = sshll.u32 %s1595, 4
          %s1606 = int_to_ptr.vmem [resolvable:$true] %s1605
          %1611 = dma.vmem_to_hbm [thread:$0]  %s1606, 256, %s1604, %s1592, 128, 128, 8
        $region44: #{tpu_custom_call.1} parent=39 // pred_fallthru
          _
      $region40: #{tpu_custom_call.1} parent=5 // pred_fallthru
        _
      %p1612 = scmp.le.s32.totalorder 2, %s14
      // Predicated region
      $region45: #{tpu_custom_call.1} parent=5 // pred_check
        %p1613 = pneg %p1612
      $region46: #{tpu_custom_call.1} parent=5 // pred_check_branch
        %1615 = sbr.rel (%p1613) target = $region48
      $region47: #{tpu_custom_call.1} parent=5 // pred_region
        %s1616 = ssub.s32 %s14, 2
        // Predicated region
        $region49: #{tpu_custom_call.1} parent=47 // pred_check
          %p1617 = pneg %p153
        $region50: #{tpu_custom_call.1} parent=47 // pred_check_branch
          %1619 = sbr.rel (%p1617) target = $region52
        $region51: #{tpu_custom_call.1} parent=47 // pred_region
          %s1620 = sand.u32 %s138, 1
          %s1621 = scalar_lea.sflag [#allocation3], %s1620
          %s1622 = sand.u32 %s138, 1
          %s1623 = smul.addr %s1622, 16
          %s1624 = scalar_lea.vmem [#allocation2], %s1623
          %1625 = dma.done %s1621, 256
        $region52: #{tpu_custom_call.1} parent=47 // pred_fallthru
          _
      $region48: #{tpu_custom_call.1} parent=5 // pred_fallthru
        _
    $region6: #{tpu_custom_call.1} parent=1 // loop_footer
      %s18 = sadd.s32 1, %s14
    $region7: #{tpu_custom_call.1} parent=1 // loop_footer_branch
      %13 = sbr.rel target = $region3
    $region8: #{tpu_custom_call.1} parent=1 // loop_exit
      _
    %1626 = vsyncpa [#allocation3], 1
    %s1627 = scalar_lea.sflag [#allocation3], 1
    %1628 = vsyncpa %s1627, 1

</llo_original>
